<compile_context>
chip_gen: v6e
topology: v6e:2x2x1
jax: 0.10.0
libtpu: 0.0.40
codegen_flags: <defaults>
</compile_context>

<pallas_src>
import functools

import jax
import jax.numpy as jnp
from jax.experimental import pallas as pl
from jax.experimental.pallas import tpu as pltpu

EPS = 1e-5          # nn.BatchNorm2d default eps
LANE = 128          # lane width: output-channel padding target
SUBLANE = 8         # f32 sublane width: contraction-dim padding target


# ---------------------------------------------------------------------------
# small helpers
# ---------------------------------------------------------------------------
def _round_up(x, m):
    return (x + m - 1) // m * m


def _pad_to(a, axis, target):
    pad = target - a.shape[axis]
    if pad == 0:
        return a
    widths = [(0, 0)] * a.ndim
    widths[axis] = (0, pad)
    return jnp.pad(a, widths)


def _vmem_limit_bytes():
    # Budget against the physical VMEM of this generation (v5e/v6e: 128 MiB,
    # v7x: 64 MiB), leaving half as headroom for double-buffering / scratch.
    cap = 128 << 20
    try:
        cap = int(getattr(pltpu.get_tpu_info(), "vmem_capacity_bytes", cap) or cap)
    except Exception:
        pass
    return max(32 << 20, min(cap // 2, 64 << 20))


def _pick_tile_m(m, row_bytes, vmem_limit):
    # Largest power-of-two tile in [128, 1024] rows whose double-buffered
    # working set fits comfortably inside the VMEM budget.
    tile = 1024
    while tile > 128 and 2 * tile * row_bytes > vmem_limit // 2:
        tile //= 2
    return min(tile, _round_up(m, 128))


def _grow_tile_m(tile_m, mp, row_bytes, vmem_limit, cap=1024):
    # Phase-2 kernels are memory bound and touch far fewer bytes per row than
    # the matmul pass, so grow the row tile (powers of two, up to `cap`) while
    # it still divides the padded M extent and the double-buffered working set
    # stays inside the VMEM budget.
    t = tile_m
    while (2 * t <= cap and 2 * t <= mp and mp % (2 * t) == 0
           and 2 * (2 * t) * row_bytes <= vmem_limit // 2):
        t *= 2
    return t


def _compiler_params(vmem_limit):
    return pltpu.CompilerParams(
        dimension_semantics=("parallel",),      # M-tiles are independent
        vmem_limit_bytes=vmem_limit)


def _cost(flops, bytes_accessed):
    try:
        return pl.CostEstimate(flops=int(flops), transcendentals=0,
                               bytes_accessed=int(bytes_accessed))
    except Exception:
        return None


def _row_spec(tile_m, cols):
    return pl.BlockSpec((tile_m, cols), lambda i: (i, 0))


def _bcast_spec(cols):
    return pl.BlockSpec((1, cols), lambda i: (0, 0))


# ---------------------------------------------------------------------------
# Pallas kernels
# ---------------------------------------------------------------------------
def _matmul_stats_kernel(x_ref, w_ref, y_ref, ps_ref):
    # One M-tile of y = x @ w (bf16 operands, f32 accumulation on the MXU)
    # plus per-tile per-channel partial sums for BatchNorm (phase 1).
    y = jnp.dot(x_ref[...], w_ref[...], preferred_element_type=jnp.float32)
    y_ref[...] = y
    s = jnp.sum(y, axis=0, keepdims=True)
    q = jnp.sum(y * y, axis=0, keepdims=True)
    ps_ref[...] = jnp.concatenate([s, q], axis=0)[None]


def _dual_matmul_stats_kernel(x1_ref, w1_ref, xd_ref, wd_ref, y1_ref, ps_ref):
    # conv1 tile + downsample 1x1-conv tile fused: only conv1's output is
    # written back (the cheap downsample matmul is recomputed in the final
    # pass), but BN partial statistics are emitted for both.
    y1 = jnp.dot(x1_ref[...], w1_ref[...], preferred_element_type=jnp.float32)
    yd = jnp.dot(xd_ref[...], wd_ref[...], preferred_element_type=jnp.float32)
    y1_ref[...] = y1
    ps_ref[...] = jnp.concatenate(
        [jnp.sum(y1, axis=0, keepdims=True),
         jnp.sum(y1 * y1, axis=0, keepdims=True),
         jnp.sum(yd, axis=0, keepdims=True),
         jnp.sum(yd * yd, axis=0, keepdims=True)], axis=0)[None]


def _bn_relu_kernel(y_ref, s_ref, b_ref, o_ref):
    # Phase 2: out = relu(y * scale + shift), stored lane-dense (bf16).
    o_ref[...] = jnp.maximum(
        y_ref[...] * s_ref[...] + b_ref[...], 0.0).astype(o_ref.dtype)


def _bn_add_relu_kernel(y_ref, s_ref, b_ref, id_ref, o_ref):
    # Phase 2 (no downsample): out = relu(bn2(y) + identity).
    out = y_ref[...] * s_ref[...] + b_ref[...] + id_ref[...]
    o_ref[...] = jnp.maximum(out, 0.0).astype(o_ref.dtype)


def _bn_add_relu_ds_kernel(y_ref, s_ref, b_ref, xd_ref, wd_ref, sd_ref, bd_ref,
                           o_ref):
    # Phase 2 (downsample): recompute the tiny 1x1 identity matmul in VMEM
    # (cheaper than round-tripping an (M, N) identity through HBM), apply
    # both BNs, add, ReLU.
    ident = jnp.dot(xd_ref[...], wd_ref[...], preferred_element_type=jnp.float32)
    out = (y_ref[...] * s_ref[...] + b_ref[...]) + (ident * sd_ref[...] + bd_ref[...])
    o_ref[...] = jnp.maximum(out, 0.0).astype(o_ref.dtype)


# ---------------------------------------------------------------------------
# pallas_call wrappers (tiled over M, fully "parallel" grid)
# ---------------------------------------------------------------------------
def _matmul_stats(patches, w, *, tile_m, vmem_limit):
    mp, k = patches.shape
    n = w.shape[1]
    grid = (mp // tile_m,)
    y, ps = pl.pallas_call(
        _matmul_stats_kernel,
        out_shape=(jax.ShapeDtypeStruct((mp, n), jnp.float32),
                   jax.ShapeDtypeStruct((grid[0], 2, n), jnp.float32)),
        grid_spec=pltpu.PrefetchScalarGridSpec(
            num_scalar_prefetch=0, grid=grid,
            in_specs=[_row_spec(tile_m, k),
                      pl.BlockSpec((k, n), lambda i: (0, 0))],
            out_specs=(_row_spec(tile_m, n),
                       pl.BlockSpec((1, 2, n), lambda i: (i, 0, 0)))),
        compiler_params=_compiler_params(vmem_limit),
        cost_estimate=_cost(2 * mp * k * n,
                            patches.size * 2 + w.size * 2 + mp * n * 4),
    )(patches, w)
    return y, jnp.sum(ps, axis=0)          # (2, n)


def _dual_matmul_stats(p1, w1, pd, wd, *, tile_m, vmem_limit):
    mp, k1 = p1.shape
    kd = pd.shape[1]
    n = w1.shape[1]
    grid = (mp // tile_m,)
    y1, ps = pl.pallas_call(
        _dual_matmul_stats_kernel,
        out_shape=(jax.ShapeDtypeStruct((mp, n), jnp.float32),
                   jax.ShapeDtypeStruct((grid[0], 4, n), jnp.float32)),
        grid_spec=pltpu.PrefetchScalarGridSpec(
            num_scalar_prefetch=0, grid=grid,
            in_specs=[_row_spec(tile_m, k1),
                      pl.BlockSpec((k1, n), lambda i: (0, 0)),
                      _row_spec(tile_m, kd),
                      pl.BlockSpec((kd, n), lambda i: (0, 0))],
            out_specs=(_row_spec(tile_m, n),
                       pl.BlockSpec((1, 4, n), lambda i: (i, 0, 0)))),
        compiler_params=_compiler_params(vmem_limit),
        cost_estimate=_cost(2 * mp * (k1 + kd) * n,
                            (p1.size + pd.size) * 2 + (w1.size + wd.size) * 2
                            + mp * n * 4),
    )(p1, w1, pd, wd)
    return y1, jnp.sum(ps, axis=0)          # (4, n)


def _bn_relu(y, scale, shift, *, tile_m, vmem_limit, out_dtype):
    mp, n = y.shape
    grid = (mp // tile_m,)
    out_bytes = jnp.dtype(out_dtype).itemsize
    return pl.pallas_call(
        _bn_relu_kernel,
        out_shape=jax.ShapeDtypeStruct((mp, n), out_dtype),
        grid_spec=pltpu.PrefetchScalarGridSpec(
            num_scalar_prefetch=0, grid=grid,
            in_specs=[_row_spec(tile_m, n), _bcast_spec(n), _bcast_spec(n)],
            out_specs=_row_spec(tile_m, n)),
        compiler_params=_compiler_params(vmem_limit),
        cost_estimate=_cost(3 * mp * n,
                            mp * n * 4 + mp * n * out_bytes + 2 * n * 4),
    )(y, scale, shift)


def _bn_add_relu(y, scale, shift, identity, *, tile_m, vmem_limit):
    mp, n = y.shape
    grid = (mp // tile_m,)
    return pl.pallas_call(
        _bn_add_relu_kernel,
        out_shape=jax.ShapeDtypeStruct((mp, n), jnp.float32),
        grid_spec=pltpu.PrefetchScalarGridSpec(
            num_scalar_prefetch=0, grid=grid,
            in_specs=[_row_spec(tile_m, n), _bcast_spec(n), _bcast_spec(n),
                      _row_spec(tile_m, n)],
            out_specs=_row_spec(tile_m, n)),
        compiler_params=_compiler_params(vmem_limit),
        cost_estimate=_cost(4 * mp * n, 3 * mp * n * 4 + 2 * n * 4),
        input_output_aliases={0: 0},        # overwrite y2 in place
    )(y, scale, shift, identity)


def _bn_add_relu_ds(y, scale, shift, pd, wd, scale_d, shift_d, *, tile_m,
                    vmem_limit):
    mp, n = y.shape
    kd = pd.shape[1]
    grid = (mp // tile_m,)
    return pl.pallas_call(
        _bn_add_relu_ds_kernel,
        out_shape=jax.ShapeDtypeStruct((mp, n), jnp.float32),
        grid_spec=pltpu.PrefetchScalarGridSpec(
            num_scalar_prefetch=0, grid=grid,
            in_specs=[_row_spec(tile_m, n), _bcast_spec(n), _bcast_spec(n),
                      _row_spec(tile_m, kd),
                      pl.BlockSpec((kd, n), lambda i: (0, 0)),
                      _bcast_spec(n), _bcast_spec(n)],
            out_specs=_row_spec(tile_m, n)),
        compiler_params=_compiler_params(vmem_limit),
        cost_estimate=_cost(2 * mp * kd * n + 6 * mp * n,
                            2 * mp * n * 4 + pd.size * 2 + wd.size * 2
                            + 4 * n * 4),
        input_output_aliases={0: 0},        # overwrite y2 in place
    )(y, scale, shift, pd, wd, scale_d, shift_d)


# ---------------------------------------------------------------------------
# JAX glue: im2col + BN stat finalization (tiny per-channel math)
# ---------------------------------------------------------------------------
def _im2col(x_nhwc, k, stride, padding):
    b, h, w, c = x_nhwc.shape
    xp = jnp.pad(x_nhwc, ((0, 0), (padding, padding), (padding, padding), (0, 0)))
    ho = (h + 2 * padding - k) // stride + 1
    wo = (w + 2 * padding - k) // stride + 1
    cols = []
    for kh in range(k):
        for kw in range(k):
            cols.append(xp[:, kh:kh + stride * ho:stride,
                           kw:kw + stride * wo:stride, :])
    patches = jnp.concatenate(cols, axis=-1)            # (b, ho, wo, k*k*c)
    return patches.reshape(b * ho * wo, k * k * c), ho, wo


def _bn_scale_shift(psum, psumsq, count, gamma, beta):
    # Finalize training-mode (biased) batch statistics from cross-tile
    # partials and fold gamma/beta into a single per-channel scale/shift so
    # the phase-2 kernel is one FMA per element.
    mean = psum / count
    var = jnp.maximum(psumsq / count - mean * mean, 0.0)    # clamp one-pass var
    scale = gamma * jax.lax.rsqrt(var + EPS)
    shift = beta - mean * scale
    return scale[None, :], shift[None, :]                   # (1, Npad) each


# ---------------------------------------------------------------------------
# ResidualBlock forward
# ---------------------------------------------------------------------------
def residual_block_forward(x_nchw, params, *, kernel_size, stride, downsample,
                           tile_m=None):
    """x_nchw: (B, Cin, H, W) float32 -> (B, Cout, Ho, Wo) float32."""
    b, cin = x_nchw.shape[0], x_nchw.shape[1]
    cout = params["w1"].shape[1]
    n_pad = _round_up(cout, LANE)
    k = kernel_size
    pad = k // 2

    x = jnp.transpose(x_nchw, (0, 2, 3, 1)).astype(jnp.float32)   # NHWC

    # im2col for conv1 (layout plumbing in JAX; the matmuls run in Pallas).
    # TODO(synk): replace JAX-side im2col with in-kernel shifted accumulation
    # to avoid the k*k HBM amplification of the patch matrices.
    p1, ho, wo = _im2col(x, k, stride, pad)
    m = b * ho * wo

    vmem_limit = _vmem_limit_bytes()
    if tile_m is None:
        row_bytes = 2 * _round_up(k * k * max(cin, cout), SUBLANE) + 12 * n_pad
        tile_m = _pick_tile_m(m, row_bytes, vmem_limit)
    tile_m = max(128, _round_up(tile_m, 128))
    mp = _round_up(m, tile_m)     # zero rows contribute 0 to BN sums (exact)

    # Memory-bound phase-2 kernels get a larger row tile when it fits.
    tile_apply = _grow_tile_m(tile_m, mp, 12 * n_pad, vmem_limit)

    # conv1 operands: pad contraction dim to x8, channels to x128, cast bf16.
    k1p = _round_up(p1.shape[1], SUBLANE)
    p1 = _pad_to(_pad_to(p1, 1, k1p), 0, mp).astype(jnp.bfloat16)
    w1 = _pad_to(_pad_to(params["w1"], 0, k1p), 1, n_pad).astype(jnp.bfloat16)
    g1 = _pad_to(params["g1"], 0, n_pad)
    b1 = _pad_to(params["b1"], 0, n_pad)

    if downsample:
        # 1x1 strided conv on the identity path, fused with conv1's stats pass.
        pd, _, _ = _im2col(x, 1, stride, 0)
        kdp = _round_up(pd.shape[1], SUBLANE)
        pd = _pad_to(_pad_to(pd, 1, kdp), 0, mp).astype(jnp.bfloat16)
        wd = _pad_to(_pad_to(params["wd"], 0, kdp), 1, n_pad).astype(jnp.bfloat16)
        gd = _pad_to(params["gd"], 0, n_pad)
        bd = _pad_to(params["bd"], 0, n_pad)

        y1, ps = _dual_matmul_stats(p1, w1, pd, wd, tile_m=tile_m,
                                    vmem_limit=vmem_limit)
        s1, t1 = _bn_scale_shift(ps[0], ps[1], m, g1, b1)
        sd, td = _bn_scale_shift(ps[2], ps[3], m, gd, bd)
    else:
        # identity = x requires stride == 1 and Cin == Cout (as in the PyTorch
        # module, whose residual add would otherwise fail).
        assert stride == 1 and cin == cout, "identity path needs stride=1, Cin=Cout"
        y1, ps = _matmul_stats(p1, w1, tile_m=tile_m, vmem_limit=vmem_limit)
        s1, t1 = _bn_scale_shift(ps[0], ps[1], m, g1, b1)

    # BN1 + ReLU (phase-2 apply); store the activation lane-dense in bf16.
    out1 = _bn_relu(y1, s1, t1, tile_m=tile_apply, vmem_limit=vmem_limit,
                    out_dtype=jnp.bfloat16)
    out1_nhwc = out1[:m, :cout].reshape(b, ho, wo, cout)

    # conv2 (stride 1, same padding) + its BN statistics.
    p2, _, _ = _im2col(out1_nhwc, k, 1, pad)
    k2p = _round_up(p2.shape[1], SUBLANE)
    p2 = _pad_to(_pad_to(p2, 1, k2p), 0, mp)                   # already bf16
    w2 = _pad_to(_pad_to(params["w2"], 0, k2p), 1, n_pad).astype(jnp.bfloat16)
    g2 = _pad_to(params["g2"], 0, n_pad)
    b2 = _pad_to(params["b2"], 0, n_pad)

    y2, ps2 = _matmul_stats(p2, w2, tile_m=tile_m, vmem_limit=vmem_limit)
    s2, t2 = _bn_scale_shift(ps2[0], ps2[1], m, g2, b2)

    # BN2 + residual add + ReLU (phase-2 apply), fused with the (recomputed)
    # downsample matmul so `identity` never touches HBM; y2 is overwritten in
    # place via input_output_aliases.
    if downsample:
        out = _bn_add_relu_ds(y2, s2, t2, pd, wd, sd, td,
                              tile_m=tile_apply, vmem_limit=vmem_limit)
    else:
        ident = _pad_to(_pad_to(x.reshape(m, cin), 1, n_pad), 0, mp)
        out = _bn_add_relu(y2, s2, t2, ident, tile_m=tile_apply,
                           vmem_limit=vmem_limit)

    out_nhwc = out[:m, :cout].reshape(b, ho, wo, cout)
    return jnp.transpose(out_nhwc, (0, 3, 1, 2))               # NCHW


# ---------------------------------------------------------------------------
# Pure-JAX reference (mirrors the kernel's bf16-operand / f32-accum numerics)
# ---------------------------------------------------------------------------
def _conv_ref(x_nhwc, w_mat, k, stride, padding):
    cin = x_nhwc.shape[-1]
    cout = w_mat.shape[-1]
    w_hwio = w_mat.reshape(k, k, cin, cout).astype(jnp.bfloat16)
    return jax.lax.conv_general_dilated(
        x_nhwc.astype(jnp.bfloat16), w_hwio, window_strides=(stride, stride),
        padding=[(padding, padding), (padding, padding)],
        dimension_numbers=("NHWC", "HWIO", "NHWC"),
        preferred_element_type=jnp.float32)


def _bn_ref(y, gamma, beta):
    mean = jnp.mean(y, axis=(0, 1, 2), keepdims=True)
    var = jnp.mean(jnp.square(y - mean), axis=(0, 1, 2), keepdims=True)
    return (y - mean) * jax.lax.rsqrt(var + EPS) * gamma + beta


def residual_block_ref(x_nchw, params, *, kernel_size, stride, downsample):
    x = jnp.transpose(x_nchw, (0, 2, 3, 1)).astype(jnp.float32)
    k, p = kernel_size, kernel_size // 2
    out = _conv_ref(x, params["w1"], k, stride, p)
    out = jnp.maximum(_bn_ref(out, params["g1"], params["b1"]), 0.0)
    out = out.astype(jnp.bfloat16).astype(jnp.float32)   # kernel stores out1 in bf16
    out = _conv_ref(out, params["w2"], k, 1, p)
    out = _bn_ref(out, params["g2"], params["b2"])
    if downsample:
        ident = _conv_ref(x, params["wd"], 1, stride, 0)
        ident = _bn_ref(ident, params["gd"], params["bd"])
    else:
        ident = x
    out = jnp.maximum(out + ident, 0.0)
    return jnp.transpose(out, (0, 3, 1, 2))


# ---------------------------------------------------------------------------
if __name__ == "__main__":
    key = jax.random.PRNGKey(0)

    def make_params(ks, cin, cout, k, downsample):
        params = {
            "w1": 0.1 * jax.random.normal(ks[0], (k * k * cin, cout), jnp.float32),
            "g1": 1.0 + 0.1 * jax.random.normal(ks[1], (cout,), jnp.float32),
            "b1": 0.1 * jax.random.normal(ks[2], (cout,), jnp.float32),
            "w2": 0.1 * jax.random.normal(ks[3], (k * k * cout, cout), jnp.float32),
            "g2": 1.0 + 0.1 * jax.random.normal(ks[4], (cout,), jnp.float32),
            "b2": 0.1 * jax.random.normal(ks[5], (cout,), jnp.float32),
        }
        if downsample:
            params["wd"] = 0.1 * jax.random.normal(ks[6], (cin, cout), jnp.float32)
            params["gd"] = jnp.ones((cout,), jnp.float32)
            params["bd"] = jnp.zeros((cout,), jnp.float32)
        return params

    configs = [
        # The module config from the spec: in=4, out=8, k=3, stride=2, downsample.
        dict(B=2, Cin=4, H=16, W=16, Cout=8, k=3, stride=2, downsample=True),
        # Identity path (stride=1, Cin==Cout, no downsample); M=512 exercises
        # the multi-tile grid, cross-tile two-phase BatchNorm reduction and
        # the larger phase-2 apply tile.
        dict(B=2, Cin=8, H=16, W=16, Cout=8, k=3, stride=1, downsample=False),
    ]

    for idx, cfg in enumerate(configs):
        ks = jax.random.split(jax.random.fold_in(key, idx), 8)
        params = make_params(ks, cfg["Cin"], cfg["Cout"], cfg["k"], cfg["downsample"])
        x = jax.random.normal(ks[7], (cfg["B"], cfg["Cin"], cfg["H"], cfg["W"]),
                              jnp.float32)

        fwd = jax.jit(functools.partial(
            residual_block_forward, kernel_size=cfg["k"], stride=cfg["stride"],
            downsample=cfg["downsample"], tile_m=128))
        out = jax.block_until_ready(fwd(x, params))

        ref = residual_block_ref(x, params, kernel_size=cfg["k"],
                                 stride=cfg["stride"], downsample=cfg["downsample"])
        ho = (cfg["H"] + 2 * (cfg["k"] // 2) - cfg["k"]) // cfg["stride"] + 1
        assert out.shape == (cfg["B"], cfg["Cout"], ho, ho), out.shape
        err = float(jnp.max(jnp.abs(out - ref)))
        assert err < 2e-2, f"config {idx}: max abs err {err}"

    print("KERNEL_OK")
</pallas_src>

<mosaic_0001>
module attributes {stable_mosaic.version = 11 : i64} {
  func.func @_dual_matmul_stats_kernel(%arg0: i32, %arg1: memref<128x40xbf16, #tpu.memory_space<vmem>>, %arg2: memref<40x128xbf16, #tpu.memory_space<vmem>>, %arg3: memref<128x8xbf16, #tpu.memory_space<vmem>>, %arg4: memref<8x128xbf16, #tpu.memory_space<vmem>>, %arg5: memref<128x128xf32, #tpu.memory_space<vmem>>, %arg6: memref<1x4x128xf32, #tpu.memory_space<vmem>>) attributes {dimension_semantics = [#tpu.dimension_semantics<parallel>], iteration_bounds = array<i64: 1>, scalar_prefetch = 0 : i64, scratch_operands = 0 : i64, tpu.core_type = #tpu.core_type<tc>, window_params = [{transform_indices = @transform_0, window_bounds = array<i64: 128, 40>}, {pipeline_mode = #tpu.pipeline_mode<synchronous>, transform_indices = @transform_1, window_bounds = array<i64: 40, 128>}, {transform_indices = @transform_2, window_bounds = array<i64: 128, 8>}, {pipeline_mode = #tpu.pipeline_mode<synchronous>, transform_indices = @transform_3, window_bounds = array<i64: 8, 128>}, {transform_indices = @transform_4, window_bounds = array<i64: 128, 128>}, {transform_indices = @transform_5, window_bounds = array<i64: 1, 4, 128>}]} {
    %c0 = arith.constant 0 : index
    %c0_0 = arith.constant 0 : index
    %0 = vector.load %arg1[%c0, %c0_0] : memref<128x40xbf16, #tpu.memory_space<vmem>>, vector<128x40xbf16>
    %c0_1 = arith.constant 0 : index
    %c0_2 = arith.constant 0 : index
    %1 = vector.load %arg2[%c0_1, %c0_2] : memref<40x128xbf16, #tpu.memory_space<vmem>>, vector<40x128xbf16>
    %cst = arith.constant dense<0.000000e+00> : vector<128x128xf32>
    %2 = tpu.matmul %0, %1, %cst {dimension_numbers = #tpu.dot_dimension_numbers<[1], [0], [0], [1], [0, 0, 1, 1], [], []>} : vector<128x40xbf16>, vector<40x128xbf16>, vector<128x128xf32> -> vector<128x128xf32>
    %c0_3 = arith.constant 0 : index
    %c0_4 = arith.constant 0 : index
    %3 = vector.load %arg3[%c0_3, %c0_4] : memref<128x8xbf16, #tpu.memory_space<vmem>>, vector<128x8xbf16>
    %c0_5 = arith.constant 0 : index
    %c0_6 = arith.constant 0 : index
    %4 = vector.load %arg4[%c0_5, %c0_6] : memref<8x128xbf16, #tpu.memory_space<vmem>>, vector<8x128xbf16>
    %cst_7 = arith.constant dense<0.000000e+00> : vector<128x128xf32>
    %5 = tpu.matmul %3, %4, %cst_7 {dimension_numbers = #tpu.dot_dimension_numbers<[1], [0], [0], [1], [0, 0, 1, 1], [], []>} : vector<128x8xbf16>, vector<8x128xbf16>, vector<128x128xf32> -> vector<128x128xf32>
    %c0_8 = arith.constant 0 : index
    %c0_9 = arith.constant 0 : index
    %6 = vector.load %arg5[%c0_8, %c0_9] : memref<128x128xf32, #tpu.memory_space<vmem>>, vector<128x128xf32>
    tpu.vector_store %arg5[%c0_8, %c0_9], %2 {strides = array<i32>} : memref<128x128xf32, #tpu.memory_space<vmem>>, vector<128x128xf32>,
    %cst_10 = arith.constant dense<0.000000e+00> : vector<128xf32>
    %7 = vector.multi_reduction <add>, %2, %cst_10 [0] : vector<128x128xf32> to vector<128xf32>
    %8 = vector.shape_cast %7 : vector<128xf32> to vector<1x128xf32>
    %9 = arith.mulf %2, %2 : vector<128x128xf32>
    %cst_11 = arith.constant dense<0.000000e+00> : vector<128xf32>
    %10 = vector.multi_reduction <add>, %9, %cst_11 [0] : vector<128x128xf32> to vector<128xf32>
    %11 = vector.shape_cast %10 : vector<128xf32> to vector<1x128xf32>
    %cst_12 = arith.constant dense<0.000000e+00> : vector<128xf32>
    %12 = vector.multi_reduction <add>, %5, %cst_12 [0] : vector<128x128xf32> to vector<128xf32>
    %13 = vector.shape_cast %12 : vector<128xf32> to vector<1x128xf32>
    %14 = arith.mulf %5, %5 : vector<128x128xf32>
    %cst_13 = arith.constant dense<0.000000e+00> : vector<128xf32>
    %15 = vector.multi_reduction <add>, %14, %cst_13 [0] : vector<128x128xf32> to vector<128xf32>
    %16 = vector.shape_cast %15 : vector<128xf32> to vector<1x128xf32>
    %17 = tpu.concatenate %8, %11, %13, %16 in 0 : vector<1x128xf32>, vector<1x128xf32>, vector<1x128xf32>, vector<1x128xf32> -> vector<4x128xf32>
    %18 = vector.shape_cast %17 : vector<4x128xf32> to vector<1x4x128xf32>
    %c0_14 = arith.constant 0 : index
    %c0_15 = arith.constant 0 : index
    %c0_16 = arith.constant 0 : index
    %19 = vector.load %arg6[%c0_14, %c0_15, %c0_16] : memref<1x4x128xf32, #tpu.memory_space<vmem>>, vector<1x4x128xf32>
    tpu.vector_store %arg6[%c0_14, %c0_15, %c0_16], %18 {strides = array<i32>} : memref<1x4x128xf32, #tpu.memory_space<vmem>>, vector<1x4x128xf32>,
    return
  }
  func.func @transform_0(%arg0: i32) -> (i32, i32) {
    %c0_i32 = arith.constant 0 : i32
    %c0_i32_0 = arith.constant 0 : i32
    return %arg0, %c0_i32 : i32, i32
  }
  func.func @transform_1(%arg0: i32) -> (i32, i32) {
    %c0_i32 = arith.constant 0 : i32
    %c0_i32_0 = arith.constant 0 : i32
    %c0_i32_1 = arith.constant 0 : i32
    return %c0_i32, %c0_i32_0 : i32, i32
  }
  func.func @transform_2(%arg0: i32) -> (i32, i32) {
    %c0_i32 = arith.constant 0 : i32
    %c0_i32_0 = arith.constant 0 : i32
    return %arg0, %c0_i32 : i32, i32
  }
  func.func @transform_3(%arg0: i32) -> (i32, i32) {
    %c0_i32 = arith.constant 0 : i32
    %c0_i32_0 = arith.constant 0 : i32
    %c0_i32_1 = arith.constant 0 : i32
    return %c0_i32, %c0_i32_0 : i32, i32
  }
  func.func @transform_4(%arg0: i32) -> (i32, i32) {
    %c0_i32 = arith.constant 0 : i32
    %c0_i32_0 = arith.constant 0 : i32
    return %arg0, %c0_i32 : i32, i32
  }
  func.func @transform_5(%arg0: i32) -> (i32, i32, i32) {
    %c0_i32 = arith.constant 0 : i32
    %c0_i32_0 = arith.constant 0 : i32
    %c0_i32_1 = arith.constant 0 : i32
    return %arg0, %c0_i32, %c0_i32_0 : i32, i32, i32
  }
}

module attributes {stable_mosaic.version = 11 : i64} {
  func.func @_bn_relu_kernel(%arg0: i32, %arg1: memref<128x128xf32, #tpu.memory_space<vmem>>, %arg2: memref<1x128xf32, #tpu.memory_space<vmem>>, %arg3: memref<1x128xf32, #tpu.memory_space<vmem>>, %arg4: memref<128x128xbf16, #tpu.memory_space<vmem>>) attributes {dimension_semantics = [#tpu.dimension_semantics<parallel>], iteration_bounds = array<i64: 1>, scalar_prefetch = 0 : i64, scratch_operands = 0 : i64, tpu.core_type = #tpu.core_type<tc>, window_params = [{transform_indices = @transform_0, window_bounds = array<i64: 128, 128>}, {pipeline_mode = #tpu.pipeline_mode<synchronous>, transform_indices = @transform_1, window_bounds = array<i64: 1, 128>}, {pipeline_mode = #tpu.pipeline_mode<synchronous>, transform_indices = @transform_2, window_bounds = array<i64: 1, 128>}, {transform_indices = @transform_3, window_bounds = array<i64: 128, 128>}]} {
    %c0 = arith.constant 0 : index
    %c0_0 = arith.constant 0 : index
    %0 = vector.load %arg1[%c0, %c0_0] : memref<128x128xf32, #tpu.memory_space<vmem>>, vector<128x128xf32>
    %c0_1 = arith.constant 0 : index
    %c0_2 = arith.constant 0 : index
    %1 = vector.load %arg2[%c0_1, %c0_2] : memref<1x128xf32, #tpu.memory_space<vmem>>, vector<1x128xf32>
    %2 = vector.broadcast %1 : vector<1x128xf32> to vector<128x128xf32>
    %3 = arith.mulf %0, %2 : vector<128x128xf32>
    %c0_3 = arith.constant 0 : index
    %c0_4 = arith.constant 0 : index
    %4 = vector.load %arg3[%c0_3, %c0_4] : memref<1x128xf32, #tpu.memory_space<vmem>>, vector<1x128xf32>
    %5 = vector.broadcast %4 : vector<1x128xf32> to vector<128x128xf32>
    %6 = arith.addf %3, %5 : vector<128x128xf32>
    %cst = arith.constant 0.000000e+00 : f32
    %7 = vector.broadcast %cst : f32 to vector<128x128xf32>
    %8 = arith.maximumf %6, %7 : vector<128x128xf32>
    %9 = arith.truncf %8 : vector<128x128xf32> to vector<128x128xbf16>
    %c0_5 = arith.constant 0 : index
    %c0_6 = arith.constant 0 : index
    %10 = vector.load %arg4[%c0_5, %c0_6] : memref<128x128xbf16, #tpu.memory_space<vmem>>, vector<128x128xbf16>
    tpu.vector_store %arg4[%c0_5, %c0_6], %9 {strides = array<i32>} : memref<128x128xbf16, #tpu.memory_space<vmem>>, vector<128x128xbf16>,
    return
  }
  func.func @transform_0(%arg0: i32) -> (i32, i32) {
    %c0_i32 = arith.constant 0 : i32
    %c0_i32_0 = arith.constant 0 : i32
    return %arg0, %c0_i32 : i32, i32
  }
  func.func @transform_1(%arg0: i32) -> (i32, i32) {
    %c0_i32 = arith.constant 0 : i32
    %c0_i32_0 = arith.constant 0 : i32
    %c0_i32_1 = arith.constant 0 : i32
    return %c0_i32, %c0_i32_0 : i32, i32
  }
  func.func @transform_2(%arg0: i32) -> (i32, i32) {
    %c0_i32 = arith.constant 0 : i32
    %c0_i32_0 = arith.constant 0 : i32
    %c0_i32_1 = arith.constant 0 : i32
    return %c0_i32, %c0_i32_0 : i32, i32
  }
  func.func @transform_3(%arg0: i32) -> (i32, i32) {
    %c0_i32 = arith.constant 0 : i32
    %c0_i32_0 = arith.constant 0 : i32
    return %arg0, %c0_i32 : i32, i32
  }
}

module attributes {stable_mosaic.version = 11 : i64} {
  func.func @_matmul_stats_kernel(%arg0: i32, %arg1: memref<128x72xbf16, #tpu.memory_space<vmem>>, %arg2: memref<72x128xbf16, #tpu.memory_space<vmem>>, %arg3: memref<128x128xf32, #tpu.memory_space<vmem>>, %arg4: memref<1x2x128xf32, #tpu.memory_space<vmem>>) attributes {dimension_semantics = [#tpu.dimension_semantics<parallel>], iteration_bounds = array<i64: 1>, scalar_prefetch = 0 : i64, scratch_operands = 0 : i64, tpu.core_type = #tpu.core_type<tc>, window_params = [{transform_indices = @transform_0, window_bounds = array<i64: 128, 72>}, {pipeline_mode = #tpu.pipeline_mode<synchronous>, transform_indices = @transform_1, window_bounds = array<i64: 72, 128>}, {transform_indices = @transform_2, window_bounds = array<i64: 128, 128>}, {transform_indices = @transform_3, window_bounds = array<i64: 1, 2, 128>}]} {
    %c0 = arith.constant 0 : index
    %c0_0 = arith.constant 0 : index
    %0 = vector.load %arg1[%c0, %c0_0] : memref<128x72xbf16, #tpu.memory_space<vmem>>, vector<128x72xbf16>
    %c0_1 = arith.constant 0 : index
    %c0_2 = arith.constant 0 : index
    %1 = vector.load %arg2[%c0_1, %c0_2] : memref<72x128xbf16, #tpu.memory_space<vmem>>, vector<72x128xbf16>
    %cst = arith.constant dense<0.000000e+00> : vector<128x128xf32>
    %2 = tpu.matmul %0, %1, %cst {dimension_numbers = #tpu.dot_dimension_numbers<[1], [0], [0], [1], [0, 0, 1, 1], [], []>} : vector<128x72xbf16>, vector<72x128xbf16>, vector<128x128xf32> -> vector<128x128xf32>
    %c0_3 = arith.constant 0 : index
    %c0_4 = arith.constant 0 : index
    %3 = vector.load %arg3[%c0_3, %c0_4] : memref<128x128xf32, #tpu.memory_space<vmem>>, vector<128x128xf32>
    tpu.vector_store %arg3[%c0_3, %c0_4], %2 {strides = array<i32>} : memref<128x128xf32, #tpu.memory_space<vmem>>, vector<128x128xf32>,
    %cst_5 = arith.constant dense<0.000000e+00> : vector<128xf32>
    %4 = vector.multi_reduction <add>, %2, %cst_5 [0] : vector<128x128xf32> to vector<128xf32>
    %5 = vector.shape_cast %4 : vector<128xf32> to vector<1x128xf32>
    %6 = arith.mulf %2, %2 : vector<128x128xf32>
    %cst_6 = arith.constant dense<0.000000e+00> : vector<128xf32>
    %7 = vector.multi_reduction <add>, %6, %cst_6 [0] : vector<128x128xf32> to vector<128xf32>
    %8 = vector.shape_cast %7 : vector<128xf32> to vector<1x128xf32>
    %9 = tpu.concatenate %5, %8 in 0 : vector<1x128xf32>, vector<1x128xf32> -> vector<2x128xf32>
    %10 = vector.shape_cast %9 : vector<2x128xf32> to vector<1x2x128xf32>
    %c0_7 = arith.constant 0 : index
    %c0_8 = arith.constant 0 : index
    %c0_9 = arith.constant 0 : index
    %11 = vector.load %arg4[%c0_7, %c0_8, %c0_9] : memref<1x2x128xf32, #tpu.memory_space<vmem>>, vector<1x2x128xf32>
    tpu.vector_store %arg4[%c0_7, %c0_8, %c0_9], %10 {strides = array<i32>} : memref<1x2x128xf32, #tpu.memory_space<vmem>>, vector<1x2x128xf32>,
    return
  }
  func.func @transform_0(%arg0: i32) -> (i32, i32) {
    %c0_i32 = arith.constant 0 : i32
    %c0_i32_0 = arith.constant 0 : i32
    return %arg0, %c0_i32 : i32, i32
  }
  func.func @transform_1(%arg0: i32) -> (i32, i32) {
    %c0_i32 = arith.constant 0 : i32
    %c0_i32_0 = arith.constant 0 : i32
    %c0_i32_1 = arith.constant 0 : i32
    return %c0_i32, %c0_i32_0 : i32, i32
  }
  func.func @transform_2(%arg0: i32) -> (i32, i32) {
    %c0_i32 = arith.constant 0 : i32
    %c0_i32_0 = arith.constant 0 : i32
    return %arg0, %c0_i32 : i32, i32
  }
  func.func @transform_3(%arg0: i32) -> (i32, i32, i32) {
    %c0_i32 = arith.constant 0 : i32
    %c0_i32_0 = arith.constant 0 : i32
    %c0_i32_1 = arith.constant 0 : i32
    return %arg0, %c0_i32, %c0_i32_0 : i32, i32, i32
  }
}

module attributes {stable_mosaic.version = 11 : i64} {
  func.func @_bn_add_relu_ds_kernel(%arg0: i32, %arg1: memref<128x128xf32, #tpu.memory_space<vmem>>, %arg2: memref<1x128xf32, #tpu.memory_space<vmem>>, %arg3: memref<1x128xf32, #tpu.memory_space<vmem>>, %arg4: memref<128x8xbf16, #tpu.memory_space<vmem>>, %arg5: memref<8x128xbf16, #tpu.memory_space<vmem>>, %arg6: memref<1x128xf32, #tpu.memory_space<vmem>>, %arg7: memref<1x128xf32, #tpu.memory_space<vmem>>, %arg8: memref<128x128xf32, #tpu.memory_space<vmem>>) attributes {dimension_semantics = [#tpu.dimension_semantics<parallel>], iteration_bounds = array<i64: 1>, scalar_prefetch = 0 : i64, scratch_operands = 0 : i64, tpu.core_type = #tpu.core_type<tc>, window_params = [{transform_indices = @transform_0, window_bounds = array<i64: 128, 128>}, {pipeline_mode = #tpu.pipeline_mode<synchronous>, transform_indices = @transform_1, window_bounds = array<i64: 1, 128>}, {pipeline_mode = #tpu.pipeline_mode<synchronous>, transform_indices = @transform_2, window_bounds = array<i64: 1, 128>}, {transform_indices = @transform_3, window_bounds = array<i64: 128, 8>}, {pipeline_mode = #tpu.pipeline_mode<synchronous>, transform_indices = @transform_4, window_bounds = array<i64: 8, 128>}, {pipeline_mode = #tpu.pipeline_mode<synchronous>, transform_indices = @transform_5, window_bounds = array<i64: 1, 128>}, {pipeline_mode = #tpu.pipeline_mode<synchronous>, transform_indices = @transform_6, window_bounds = array<i64: 1, 128>}, {transform_indices = @transform_7, window_bounds = array<i64: 128, 128>}]} {
    %c0 = arith.constant 0 : index
    %c0_0 = arith.constant 0 : index
    %0 = vector.load %arg4[%c0, %c0_0] : memref<128x8xbf16, #tpu.memory_space<vmem>>, vector<128x8xbf16>
    %c0_1 = arith.constant 0 : index
    %c0_2 = arith.constant 0 : index
    %1 = vector.load %arg5[%c0_1, %c0_2] : memref<8x128xbf16, #tpu.memory_space<vmem>>, vector<8x128xbf16>
    %cst = arith.constant dense<0.000000e+00> : vector<128x128xf32>
    %2 = tpu.matmul %0, %1, %cst {dimension_numbers = #tpu.dot_dimension_numbers<[1], [0], [0], [1], [0, 0, 1, 1], [], []>} : vector<128x8xbf16>, vector<8x128xbf16>, vector<128x128xf32> -> vector<128x128xf32>
    %c0_3 = arith.constant 0 : index
    %c0_4 = arith.constant 0 : index
    %3 = vector.load %arg1[%c0_3, %c0_4] : memref<128x128xf32, #tpu.memory_space<vmem>>, vector<128x128xf32>
    %c0_5 = arith.constant 0 : index
    %c0_6 = arith.constant 0 : index
    %4 = vector.load %arg2[%c0_5, %c0_6] : memref<1x128xf32, #tpu.memory_space<vmem>>, vector<1x128xf32>
    %5 = vector.broadcast %4 : vector<1x128xf32> to vector<128x128xf32>
    %6 = arith.mulf %3, %5 : vector<128x128xf32>
    %c0_7 = arith.constant 0 : index
    %c0_8 = arith.constant 0 : index
    %7 = vector.load %arg3[%c0_7, %c0_8] : memref<1x128xf32, #tpu.memory_space<vmem>>, vector<1x128xf32>
    %8 = vector.broadcast %7 : vector<1x128xf32> to vector<128x128xf32>
    %9 = arith.addf %6, %8 : vector<128x128xf32>
    %c0_9 = arith.constant 0 : index
    %c0_10 = arith.constant 0 : index
    %10 = vector.load %arg6[%c0_9, %c0_10] : memref<1x128xf32, #tpu.memory_space<vmem>>, vector<1x128xf32>
    %11 = vector.broadcast %10 : vector<1x128xf32> to vector<128x128xf32>
    %12 = arith.mulf %2, %11 : vector<128x128xf32>
    %c0_11 = arith.constant 0 : index
    %c0_12 = arith.constant 0 : index
    %13 = vector.load %arg7[%c0_11, %c0_12] : memref<1x128xf32, #tpu.memory_space<vmem>>, vector<1x128xf32>
    %14 = vector.broadcast %13 : vector<1x128xf32> to vector<128x128xf32>
    %15 = arith.addf %12, %14 : vector<128x128xf32>
    %16 = arith.addf %9, %15 : vector<128x128xf32>
    %cst_13 = arith.constant 0.000000e+00 : f32
    %17 = vector.broadcast %cst_13 : f32 to vector<128x128xf32>
    %18 = arith.maximumf %16, %17 : vector<128x128xf32>
    %c0_14 = arith.constant 0 : index
    %c0_15 = arith.constant 0 : index
    %19 = vector.load %arg8[%c0_14, %c0_15] : memref<128x128xf32, #tpu.memory_space<vmem>>, vector<128x128xf32>
    tpu.vector_store %arg8[%c0_14, %c0_15], %18 {strides = array<i32>} : memref<128x128xf32, #tpu.memory_space<vmem>>, vector<128x128xf32>,
    return
  }
  func.func @transform_0(%arg0: i32) -> (i32, i32) {
    %c0_i32 = arith.constant 0 : i32
    %c0_i32_0 = arith.constant 0 : i32
    return %arg0, %c0_i32 : i32, i32
  }
  func.func @transform_1(%arg0: i32) -> (i32, i32) {
    %c0_i32 = arith.constant 0 : i32
    %c0_i32_0 = arith.constant 0 : i32
    %c0_i32_1 = arith.constant 0 : i32
    return %c0_i32, %c0_i32_0 : i32, i32
  }
  func.func @transform_2(%arg0: i32) -> (i32, i32) {
    %c0_i32 = arith.constant 0 : i32
    %c0_i32_0 = arith.constant 0 : i32
    %c0_i32_1 = arith.constant 0 : i32
    return %c0_i32, %c0_i32_0 : i32, i32
  }
  func.func @transform_3(%arg0: i32) -> (i32, i32) {
    %c0_i32 = arith.constant 0 : i32
    %c0_i32_0 = arith.constant 0 : i32
    return %arg0, %c0_i32 : i32, i32
  }
  func.func @transform_4(%arg0: i32) -> (i32, i32) {
    %c0_i32 = arith.constant 0 : i32
    %c0_i32_0 = arith.constant 0 : i32
    %c0_i32_1 = arith.constant 0 : i32
    return %c0_i32, %c0_i32_0 : i32, i32
  }
  func.func @transform_5(%arg0: i32) -> (i32, i32) {
    %c0_i32 = arith.constant 0 : i32
    %c0_i32_0 = arith.constant 0 : i32
    %c0_i32_1 = arith.constant 0 : i32
    return %c0_i32, %c0_i32_0 : i32, i32
  }
  func.func @transform_6(%arg0: i32) -> (i32, i32) {
    %c0_i32 = arith.constant 0 : i32
    %c0_i32_0 = arith.constant 0 : i32
    %c0_i32_1 = arith.constant 0 : i32
    return %c0_i32, %c0_i32_0 : i32, i32
  }
  func.func @transform_7(%arg0: i32) -> (i32, i32) {
    %c0_i32 = arith.constant 0 : i32
    %c0_i32_0 = arith.constant 0 : i32
    return %arg0, %c0_i32 : i32, i32
  }
}

</mosaic_0001>

<llo_original>
// kernel: residual_block_forward.5
$region0: #{residual_block_forward.5}
  #allocation0 [shape = 'u32[]', space=smem, size = 0x4, offset = 0x4, fixed_abs, tag = 'smem constant byte address 0x4 - core index']
  #allocation1 [shape = 'u32[144,128]{1,0:T(1,128)}', space=vmem, size = 0x12000, scoped, tag = 'internal scratch']
  %s0 = inlined_call_operand.vmem [shape: f32[128,128], index: 0, kind: input, shape index: {}]
  %s1 = inlined_call_operand.vmem [shape: f32[1,128], index: 1, kind: input, shape index: {}]
  %s2 = inlined_call_operand.vmem [shape: f32[1,128], index: 2, kind: input, shape index: {}]
  %s3 = inlined_call_operand.vmem [shape: bf16[128,128], index: 3, kind: output, shape index: {}]
  %s4 = sld [smem:[#allocation0]]
  $region22: #{residual_block_forward.5} parent=0
    _
  %s6 = ssub.s32 1, %s4
  %s7 = scalar_select 0, %s6, %s4
  // Predicated region
  $region2: #{residual_block_forward.5} parent=0 // pred_check
    _
  $region3: #{residual_block_forward.5} parent=0 // pred_check_branch
    %9 = sbr.rel (0) target = $region5
  $region4: #{residual_block_forward.5} parent=0 // pred_region
    _
  $region5: #{residual_block_forward.5} parent=0 // pred_fallthru
    _
  // Predicated region
  $region6: #{residual_block_forward.5} parent=0 // pred_check
    _
  $region7: #{residual_block_forward.5} parent=0 // pred_check_branch
    %11 = sbr.rel (0) target = $region9
  $region8: #{residual_block_forward.5} parent=0 // pred_region
    _
  $region9: #{residual_block_forward.5} parent=0 // pred_fallthru
    _
  // Predicated region
  $region10: #{residual_block_forward.5} parent=0 // pred_check
    _
  $region11: #{residual_block_forward.5} parent=0 // pred_check_branch
    %13 = sbr.rel (0) target = $region13
  $region12: #{residual_block_forward.5} parent=0 // pred_region
    _
  $region13: #{residual_block_forward.5} parent=0 // pred_fallthru
    _
  %v14 = vld [vmem:[%s0] sm:$0xff]
  %v15 = vld [vmem:[%s0 + $0x8] sm:$0xff]
  %v16 = vld [vmem:[%s0 + $0x10] sm:$0xff]
  %v17 = vld [vmem:[%s0 + $0x18] sm:$0xff]
  %v18 = vld [vmem:[%s0 + $0x20] sm:$0xff]
  %v19 = vld [vmem:[%s0 + $0x28] sm:$0xff]
  %v20 = vld [vmem:[%s0 + $0x30] sm:$0xff]
  %v21 = vld [vmem:[%s0 + $0x38] sm:$0xff]
  %v22 = vld [vmem:[%s0 + $0x40] sm:$0xff]
  %v23 = vld [vmem:[%s0 + $0x48] sm:$0xff]
  %v24 = vld [vmem:[%s0 + $0x50] sm:$0xff]
  %v25 = vld [vmem:[%s0 + $0x58] sm:$0xff]
  %v26 = vld [vmem:[%s0 + $0x60] sm:$0xff]
  %v27 = vld [vmem:[%s0 + $0x68] sm:$0xff]
  %v28 = vld [vmem:[%s0 + $0x70] sm:$0xff]
  %v29 = vld [vmem:[%s0 + $0x78] sm:$0xff]
  %v30 = vld [vmem:[%s1] sm:$0x1]
  %v32 = vlaneseq
  %v33 = vshrl.u32 %v32, 7
  %v34 = vsub.s32 0, %v33
  %v35 = vrot.slane %v30, %v34
  %v37 = vmul.f32 %v14, %v35
  %v38 = vmul.f32 %v15, %v35
  %v39 = vmul.f32 %v16, %v35
  %v40 = vmul.f32 %v17, %v35
  %v41 = vmul.f32 %v18, %v35
  %v42 = vmul.f32 %v19, %v35
  %v43 = vmul.f32 %v20, %v35
  %v44 = vmul.f32 %v21, %v35
  %v45 = vmul.f32 %v22, %v35
  %v46 = vmul.f32 %v23, %v35
  %v47 = vmul.f32 %v24, %v35
  %v48 = vmul.f32 %v25, %v35
  %v49 = vmul.f32 %v26, %v35
  %v50 = vmul.f32 %v27, %v35
  %v51 = vmul.f32 %v28, %v35
  %v52 = vmul.f32 %v29, %v35
  %v53 = vld [vmem:[%s2] sm:$0x1]
  %v55 = vlaneseq
  %v56 = vshrl.u32 %v55, 7
  %v57 = vsub.s32 0, %v56
  %v58 = vrot.slane %v53, %v57
  %v60 = vadd.f32 %v37, %v58
  %v61 = vadd.f32 %v38, %v58
  %v62 = vadd.f32 %v39, %v58
  %v63 = vadd.f32 %v40, %v58
  %v64 = vadd.f32 %v41, %v58
  %v65 = vadd.f32 %v42, %v58
  %v66 = vadd.f32 %v43, %v58
  %v67 = vadd.f32 %v44, %v58
  %v68 = vadd.f32 %v45, %v58
  %v69 = vadd.f32 %v46, %v58
  %v70 = vadd.f32 %v47, %v58
  %v71 = vadd.f32 %v48, %v58
  %v72 = vadd.f32 %v49, %v58
  %v73 = vadd.f32 %v50, %v58
  %v74 = vadd.f32 %v51, %v58
  %v75 = vadd.f32 %v52, %v58
  %v76 = vmax.f32 %v60, 0.0
  %v77 = vmax.f32 %v61, 0.0
  %v78 = vmax.f32 %v62, 0.0
  %v79 = vmax.f32 %v63, 0.0
  %v80 = vmax.f32 %v64, 0.0
  %v81 = vmax.f32 %v65, 0.0
  %v82 = vmax.f32 %v66, 0.0
  %v83 = vmax.f32 %v67, 0.0
  %v84 = vmax.f32 %v68, 0.0
  %v85 = vmax.f32 %v69, 0.0
  %v86 = vmax.f32 %v70, 0.0
  %v87 = vmax.f32 %v71, 0.0
  %v88 = vmax.f32 %v72, 0.0
  %v89 = vmax.f32 %v73, 0.0
  %v90 = vmax.f32 %v74, 0.0
  %v91 = vmax.f32 %v75, 0.0
  %v92 = vpack.c.bf16 %v77, %v76
  %v93 = vpack.c.bf16 %v79, %v78
  %v94 = vpack.c.bf16 %v81, %v80
  %v95 = vpack.c.bf16 %v83, %v82
  %v96 = vpack.c.bf16 %v85, %v84
  %v97 = vpack.c.bf16 %v87, %v86
  %v98 = vpack.c.bf16 %v89, %v88
  %v99 = vpack.c.bf16 %v91, %v90
  %v108 = vunpack.c.l.b16 %v92
  %v109 = vunpack.c.h.b16 %v92
  %v110 = vunpack.c.l.b16 %v93
  %v111 = vunpack.c.h.b16 %v93
  %v112 = vunpack.c.l.b16 %v94
  %v113 = vunpack.c.h.b16 %v94
  %v114 = vunpack.c.l.b16 %v95
  %v115 = vunpack.c.h.b16 %v95
  %v116 = vunpack.c.l.b16 %v96
  %v117 = vunpack.c.h.b16 %v96
  %v118 = vunpack.c.l.b16 %v97
  %v119 = vunpack.c.h.b16 %v97
  %v120 = vunpack.c.l.b16 %v98
  %v121 = vunpack.c.h.b16 %v98
  %v122 = vunpack.c.l.b16 %v99
  %v123 = vunpack.c.h.b16 %v99
  %v124 = vpack.c.b16 %v108, %v108
  %v125 = vpack.c.b16 %v109, %v109
  %v126 = vpack.c.b16 %v110, %v110
  %v127 = vpack.c.b16 %v111, %v111
  %v128 = vpack.c.b16 %v112, %v112
  %v129 = vpack.c.b16 %v113, %v113
  %v130 = vpack.c.b16 %v114, %v114
  %v131 = vpack.c.b16 %v115, %v115
  %v132 = vpack.c.b16 %v116, %v116
  %v133 = vpack.c.b16 %v117, %v117
  %v134 = vpack.c.b16 %v118, %v118
  %v135 = vpack.c.b16 %v119, %v119
  %v136 = vpack.c.b16 %v120, %v120
  %v137 = vpack.c.b16 %v121, %v121
  %v138 = vpack.c.b16 %v122, %v122
  %v139 = vpack.c.b16 %v123, %v123
  %156 = vst [vmem:[%s3] sm:$0xf] %v124
  %157 = vst [vmem:[%s3 + $0x4] sm:$0xf] %v125
  %158 = vst [vmem:[%s3 + $0x8] sm:$0xf] %v126
  %159 = vst [vmem:[%s3 + $0xc] sm:$0xf] %v127
  %160 = vst [vmem:[%s3 + $0x10] sm:$0xf] %v128
  %161 = vst [vmem:[%s3 + $0x14] sm:$0xf] %v129
  %162 = vst [vmem:[%s3 + $0x18] sm:$0xf] %v130
  %163 = vst [vmem:[%s3 + $0x1c] sm:$0xf] %v131
  %164 = vst [vmem:[%s3 + $0x20] sm:$0xf] %v132
  %165 = vst [vmem:[%s3 + $0x24] sm:$0xf] %v133
  %166 = vst [vmem:[%s3 + $0x28] sm:$0xf] %v134
  %167 = vst [vmem:[%s3 + $0x2c] sm:$0xf] %v135
  %168 = vst [vmem:[%s3 + $0x30] sm:$0xf] %v136
  %169 = vst [vmem:[%s3 + $0x34] sm:$0xf] %v137
  %170 = vst [vmem:[%s3 + $0x38] sm:$0xf] %v138
  %171 = vst [vmem:[%s3 + $0x3c] sm:$0xf] %v139
  // Predicated region
  $region14: #{residual_block_forward.5} parent=0 // pred_check
    _
  $region15: #{residual_block_forward.5} parent=0 // pred_check_branch
    %173 = sbr.rel (0) target = $region17
  $region16: #{residual_block_forward.5} parent=0 // pred_region
    _
  $region17: #{residual_block_forward.5} parent=0 // pred_fallthru
    _
  // Predicated region
  $region18: #{residual_block_forward.5} parent=0 // pred_check
    _
  $region19: #{residual_block_forward.5} parent=0 // pred_check_branch
    %175 = sbr.rel (0) target = $region21
  $region20: #{residual_block_forward.5} parent=0 // pred_region
    _
  $region21: #{residual_block_forward.5} parent=0 // pred_fallthru
    _

// kernel: residual_block_forward.4
$region0: #{residual_block_forward.4}
  #allocation0 [shape = 'u32[]', space=smem, size = 0x4, offset = 0x4, fixed_abs, tag = 'smem constant byte address 0x4 - core index']
  #allocation1 [shape = 'u32[144,128]{1,0:T(1,128)}', space=vmem, size = 0x12000, scoped, tag = 'internal scratch']
  %s0 = inlined_call_operand.vmem [shape: bf16[128,40], index: 0, kind: input, shape index: {}]
  %s1 = inlined_call_operand.vmem [shape: bf16[40,128], index: 1, kind: input, shape index: {}]
  %s2 = inlined_call_operand.vmem [shape: bf16[128,8], index: 2, kind: input, shape index: {}]
  %s3 = inlined_call_operand.vmem [shape: bf16[8,128], index: 3, kind: input, shape index: {}]
  %s4 = inlined_call_operand.vmem [shape: f32[128,128], index: 4, kind: output, shape index: {0}]
  %s5 = inlined_call_operand.vmem [shape: f32[1,4,128], index: 5, kind: output, shape index: {1}]
  %6 = xla_tuple %s4, %s5
  %s7 = sld [smem:[#allocation0]]
  $region34: #{residual_block_forward.4} parent=0
    _
  %s9 = ssub.s32 1, %s7
  %s10 = scalar_select 0, %s9, %s7
  // Predicated region
  $region2: #{residual_block_forward.4} parent=0 // pred_check
    _
  $region3: #{residual_block_forward.4} parent=0 // pred_check_branch
    %12 = sbr.rel (0) target = $region5
  $region4: #{residual_block_forward.4} parent=0 // pred_region
    _
  $region5: #{residual_block_forward.4} parent=0 // pred_fallthru
    _
  // Predicated region
  $region6: #{residual_block_forward.4} parent=0 // pred_check
    _
  $region7: #{residual_block_forward.4} parent=0 // pred_check_branch
    %14 = sbr.rel (0) target = $region9
  $region8: #{residual_block_forward.4} parent=0 // pred_region
    _
  $region9: #{residual_block_forward.4} parent=0 // pred_fallthru
    _
  // Predicated region
  $region10: #{residual_block_forward.4} parent=0 // pred_check
    _
  $region11: #{residual_block_forward.4} parent=0 // pred_check_branch
    %16 = sbr.rel (0) target = $region13
  $region12: #{residual_block_forward.4} parent=0 // pred_region
    _
  $region13: #{residual_block_forward.4} parent=0 // pred_fallthru
    _
  // Predicated region
  $region14: #{residual_block_forward.4} parent=0 // pred_check
    _
  $region15: #{residual_block_forward.4} parent=0 // pred_check_branch
    %18 = sbr.rel (0) target = $region17
  $region16: #{residual_block_forward.4} parent=0 // pred_region
    _
  $region17: #{residual_block_forward.4} parent=0 // pred_fallthru
    _
  %v20 = vld [vmem:[%s0] sm:$0xf]
  %v21 = vld [vmem:[%s0 + $0x4] sm:$0xf]
  %v22 = vld [vmem:[%s0 + $0x8] sm:$0xf]
  %v23 = vld [vmem:[%s0 + $0xc] sm:$0xf]
  %v24 = vld [vmem:[%s0 + $0x10] sm:$0xf]
  %v25 = vld [vmem:[%s0 + $0x14] sm:$0xf]
  %v26 = vld [vmem:[%s0 + $0x18] sm:$0xf]
  %v27 = vld [vmem:[%s0 + $0x1c] sm:$0xf]
  %v28 = vld [vmem:[%s0 + $0x20] sm:$0xf]
  %v29 = vld [vmem:[%s0 + $0x24] sm:$0xf]
  %v30 = vld [vmem:[%s0 + $0x28] sm:$0xf]
  %v31 = vld [vmem:[%s0 + $0x2c] sm:$0xf]
  %v32 = vld [vmem:[%s0 + $0x30] sm:$0xf]
  %v33 = vld [vmem:[%s0 + $0x34] sm:$0xf]
  %v34 = vld [vmem:[%s0 + $0x38] sm:$0xf]
  %v35 = vld [vmem:[%s0 + $0x3c] sm:$0xf]
  %v36 = vld [vmem:[%s1] sm:$0xf]
  %v37 = vld [vmem:[%s1 + $0x4] sm:$0xf]
  %v38 = vld [vmem:[%s1 + $0x8] sm:$0xf]
  %v39 = vld [vmem:[%s1 + $0xc] sm:$0xf]
  %v40 = vld [vmem:[%s1 + $0x10] sm:$0xf]
  %v57 = vunpack.c.l.b16 %v20
  %v58 = vunpack.c.l.b16 %v21
  %v59 = vunpack.c.l.b16 %v22
  %v60 = vunpack.c.l.b16 %v23
  %v61 = vunpack.c.l.b16 %v24
  %v62 = vunpack.c.l.b16 %v25
  %v63 = vunpack.c.l.b16 %v26
  %v64 = vunpack.c.l.b16 %v27
  %v65 = vunpack.c.l.b16 %v28
  %v66 = vunpack.c.l.b16 %v29
  %v67 = vunpack.c.l.b16 %v30
  %v68 = vunpack.c.l.b16 %v31
  %v69 = vunpack.c.l.b16 %v32
  %v70 = vunpack.c.l.b16 %v33
  %v71 = vunpack.c.l.b16 %v34
  %v72 = vunpack.c.l.b16 %v35
  %v73 = vpack.c.b16 %v58, %v57
  %v74 = vpack.c.b16 %v60, %v59
  %v75 = vpack.c.b16 %v62, %v61
  %v76 = vpack.c.b16 %v64, %v63
  %v77 = vpack.c.b16 %v66, %v65
  %v78 = vpack.c.b16 %v68, %v67
  %v79 = vpack.c.b16 %v70, %v69
  %v80 = vpack.c.b16 %v72, %v71
  %v86 = vunpack.c.l.b16 %v36
  %v87 = vunpack.c.l.b16 %v37
  %v88 = vunpack.c.l.b16 %v38
  %v89 = vunpack.c.l.b16 %v39
  %v90 = vunpack.c.l.b16 %v40
  %v91 = vpack.c.b16 %v87, %v86
  %v92 = vpack.c.b16 %v89, %v88
  %v93 = vpack.c.b16 %v90, %v90
  %vm96 = vcmask 326656
  %v98 = vsel %vm96, %v73, 0
  %v101 = vsel %vm96, %v74, 0
  %v104 = vsel %vm96, %v75, 0
  %v107 = vsel %vm96, %v76, 0
  %v110 = vsel %vm96, %v77, 0
  %v113 = vsel %vm96, %v78, 0
  %v116 = vsel %vm96, %v79, 0
  %v119 = vsel %vm96, %v80, 0
  %vm121 = vcmask 1043456
  %v123 = vsel %vm121, %v93, 0
  %125 = vmatprep.subr.bf16.mxu0 0
  %126 = vmatpush1.bf16.msra.mxu0 0
  %127 = vmatprep.subr.bf16.mxu0 0
  %128 = vmatpush1.bf16.msra.mxu0 0
  %129 = vmatprep.subr.bf16.mxu0 0
  %130 = vmatpush1.bf16.msra.mxu0 0
  %131 = vmatprep.subr.bf16.mxu0 0
  %132 = vmatpush1.bf16.msra.mxu0 0
  %133 = vmatprep.subr.bf16.mxu0 0
  %134 = vmatpush1.bf16.msra.mxu0 0
  %135 = vmatprep.subr.bf16.mxu0 0
  %136 = vmatpush1.bf16.msra.mxu0 %v123
  %137 = vmatprep.subr.bf16.mxu0 0
  %138 = vmatpush1.bf16.msra.mxu0 %v92
  %139 = vmatprep.subr.bf16.mxu0 0
  %140 = vmatpush1.bf16.msra.mxu0 %v91
  %141 = vmatprep.subr.bf16.mxu0 0
  %142 = vmatpush2.bf16.msra.mxu0 0
  %143 = vmatprep.subr.bf16.mxu0 0
  %144 = vmatpush2.bf16.msra.mxu0 0
  %145 = vmatprep.subr.bf16.mxu0 0
  %146 = vmatpush2.bf16.msra.mxu0 0
  %147 = vmatprep.subr.bf16.mxu0 0
  %148 = vmatpush2.bf16.msra.mxu0 0
  %149 = vmatprep.subr.bf16.mxu0 0
  %150 = vmatpush2.bf16.msra.mxu0 0
  %151 = vmatprep.subr.bf16.mxu0 0
  %152 = vmatpush2.bf16.msra.mxu0 0
  %153 = vmatprep.subr.bf16.mxu0 0
  %154 = vmatpush2.bf16.msra.mxu0 0
  %155 = vmatprep.subr.bf16.mxu0 0
  %156 = vmatpush2.bf16.msra.mxu0 0
  %157 = vmatprep.mubr.bf16.mxu0 0
  %158 = vmatmul.mubr.bf16.gmra.mxu0 %v98
  %v159 = vpop.f32.mrf.mxu0
  %v160 = vadd.f32 0.0, %v159
  %v161 = vpop.f32.mrf.mxu0
  %v162 = vpop.f32.mrf.mxu0
  %v163 = vadd.f32 0.0, %v162
  %v164 = vpop.f32.mrf.mxu0
  %165 = vmatprep.mubr.bf16.mxu0 0
  %166 = vmatmul.mubr.bf16.gmra.mxu0 %v101
  %v167 = vpop.f32.mrf.mxu0
  %v168 = vadd.f32 0.0, %v167
  %v169 = vpop.f32.mrf.mxu0
  %v170 = vpop.f32.mrf.mxu0
  %v171 = vadd.f32 0.0, %v170
  %v172 = vpop.f32.mrf.mxu0
  %173 = vmatprep.mubr.bf16.mxu0 0
  %174 = vmatmul.mubr.bf16.gmra.mxu0 %v104
  %v175 = vpop.f32.mrf.mxu0
  %v176 = vadd.f32 0.0, %v175
  %v177 = vpop.f32.mrf.mxu0
  %v178 = vpop.f32.mrf.mxu0
  %v179 = vadd.f32 0.0, %v178
  %v180 = vpop.f32.mrf.mxu0
  %181 = vmatprep.mubr.bf16.mxu0 0
  %182 = vmatmul.mubr.bf16.gmra.mxu0 %v107
  %v183 = vpop.f32.mrf.mxu0
  %v184 = vadd.f32 0.0, %v183
  %v185 = vpop.f32.mrf.mxu0
  %v186 = vpop.f32.mrf.mxu0
  %v187 = vadd.f32 0.0, %v186
  %v188 = vpop.f32.mrf.mxu0
  %189 = vmatprep.mubr.bf16.mxu0 0
  %190 = vmatmul.mubr.bf16.gmra.mxu0 %v110
  %v191 = vpop.f32.mrf.mxu0
  %v192 = vadd.f32 0.0, %v191
  %v193 = vpop.f32.mrf.mxu0
  %v194 = vpop.f32.mrf.mxu0
  %v195 = vadd.f32 0.0, %v194
  %v196 = vpop.f32.mrf.mxu0
  %197 = vmatprep.mubr.bf16.mxu0 0
  %198 = vmatmul.mubr.bf16.gmra.mxu0 %v113
  %v199 = vpop.f32.mrf.mxu0
  %v200 = vadd.f32 0.0, %v199
  %v201 = vpop.f32.mrf.mxu0
  %v202 = vpop.f32.mrf.mxu0
  %v203 = vadd.f32 0.0, %v202
  %v204 = vpop.f32.mrf.mxu0
  %205 = vmatprep.mubr.bf16.mxu0 0
  %206 = vmatmul.mubr.bf16.gmra.mxu0 %v116
  %v207 = vpop.f32.mrf.mxu0
  %v208 = vadd.f32 0.0, %v207
  %v209 = vpop.f32.mrf.mxu0
  %v210 = vpop.f32.mrf.mxu0
  %v211 = vadd.f32 0.0, %v210
  %v212 = vpop.f32.mrf.mxu0
  %213 = vmatprep.mubr.bf16.mxu0 0
  %214 = vmatmul.mubr.bf16.gmra.mxu0 %v119
  %v215 = vpop.f32.mrf.mxu0
  %v216 = vadd.f32 0.0, %v215
  %v217 = vpop.f32.mrf.mxu0
  %v218 = vpop.f32.mrf.mxu0
  %v219 = vadd.f32 0.0, %v218
  %v220 = vpop.f32.mrf.mxu0
  %221 = vdwg.mxu0
  %v222 = vld [vmem:[%s2] sm:$0xf]
  %v223 = vld [vmem:[%s2 + $0x4] sm:$0xf]
  %v224 = vld [vmem:[%s2 + $0x8] sm:$0xf]
  %v225 = vld [vmem:[%s2 + $0xc] sm:$0xf]
  %v226 = vld [vmem:[%s2 + $0x10] sm:$0xf]
  %v227 = vld [vmem:[%s2 + $0x14] sm:$0xf]
  %v228 = vld [vmem:[%s2 + $0x18] sm:$0xf]
  %v229 = vld [vmem:[%s2 + $0x1c] sm:$0xf]
  %v230 = vld [vmem:[%s2 + $0x20] sm:$0xf]
  %v231 = vld [vmem:[%s2 + $0x24] sm:$0xf]
  %v232 = vld [vmem:[%s2 + $0x28] sm:$0xf]
  %v233 = vld [vmem:[%s2 + $0x2c] sm:$0xf]
  %v234 = vld [vmem:[%s2 + $0x30] sm:$0xf]
  %v235 = vld [vmem:[%s2 + $0x34] sm:$0xf]
  %v236 = vld [vmem:[%s2 + $0x38] sm:$0xf]
  %v237 = vld [vmem:[%s2 + $0x3c] sm:$0xf]
  %v238 = vld [vmem:[%s3] sm:$0xf]
  %v255 = vunpack.c.l.b16 %v222
  %v256 = vunpack.c.l.b16 %v223
  %v257 = vunpack.c.l.b16 %v224
  %v258 = vunpack.c.l.b16 %v225
  %v259 = vunpack.c.l.b16 %v226
  %v260 = vunpack.c.l.b16 %v227
  %v261 = vunpack.c.l.b16 %v228
  %v262 = vunpack.c.l.b16 %v229
  %v263 = vunpack.c.l.b16 %v230
  %v264 = vunpack.c.l.b16 %v231
  %v265 = vunpack.c.l.b16 %v232
  %v266 = vunpack.c.l.b16 %v233
  %v267 = vunpack.c.l.b16 %v234
  %v268 = vunpack.c.l.b16 %v235
  %v269 = vunpack.c.l.b16 %v236
  %v270 = vunpack.c.l.b16 %v237
  %v271 = vpack.c.b16 %v256, %v255
  %v272 = vpack.c.b16 %v258, %v257
  %v273 = vpack.c.b16 %v260, %v259
  %v274 = vpack.c.b16 %v262, %v261
  %v275 = vpack.c.b16 %v264, %v263
  %v276 = vpack.c.b16 %v266, %v265
  %v277 = vpack.c.b16 %v268, %v267
  %v278 = vpack.c.b16 %v270, %v269
  %vm279 = vcmask 64512
  %v281 = vsel %vm279, %v271, 0
  %v284 = vsel %vm279, %v272, 0
  %v287 = vsel %vm279, %v273, 0
  %v290 = vsel %vm279, %v274, 0
  %v293 = vsel %vm279, %v275, 0
  %v296 = vsel %vm279, %v276, 0
  %v299 = vsel %vm279, %v277, 0
  %v302 = vsel %vm279, %v278, 0
  %v305 = vsel %vm121, %v238, 0
  %307 = vmatprep.subr.bf16.mxu0 0
  %308 = vmatpush1.bf16.msra.mxu0 0
  %309 = vmatprep.subr.bf16.mxu0 0
  %310 = vmatpush1.bf16.msra.mxu0 0
  %311 = vmatprep.subr.bf16.mxu0 0
  %312 = vmatpush1.bf16.msra.mxu0 0
  %313 = vmatprep.subr.bf16.mxu0 0
  %314 = vmatpush1.bf16.msra.mxu0 0
  %315 = vmatprep.subr.bf16.mxu0 0
  %316 = vmatpush1.bf16.msra.mxu0 0
  %317 = vmatprep.subr.bf16.mxu0 0
  %318 = vmatpush1.bf16.msra.mxu0 0
  %319 = vmatprep.subr.bf16.mxu0 0
  %320 = vmatpush1.bf16.msra.mxu0 0
  %321 = vmatprep.subr.bf16.mxu0 0
  %322 = vmatpush1.bf16.msra.mxu0 %v305
  %323 = vmatprep.subr.bf16.mxu0 0
  %324 = vmatpush2.bf16.msra.mxu0 0
  %325 = vmatprep.subr.bf16.mxu0 0
  %326 = vmatpush2.bf16.msra.mxu0 0
  %327 = vmatprep.subr.bf16.mxu0 0
  %328 = vmatpush2.bf16.msra.mxu0 0
  %329 = vmatprep.subr.bf16.mxu0 0
  %330 = vmatpush2.bf16.msra.mxu0 0
  %331 = vmatprep.subr.bf16.mxu0 0
  %332 = vmatpush2.bf16.msra.mxu0 0
  %333 = vmatprep.subr.bf16.mxu0 0
  %334 = vmatpush2.bf16.msra.mxu0 0
  %335 = vmatprep.subr.bf16.mxu0 0
  %336 = vmatpush2.bf16.msra.mxu0 0
  %337 = vmatprep.subr.bf16.mxu0 0
  %338 = vmatpush2.bf16.msra.mxu0 0
  %339 = vmatprep.mubr.bf16.mxu0 0
  %340 = vmatmul.mubr.bf16.gmra.mxu0 %v281
  %v341 = vpop.f32.mrf.mxu0
  %v342 = vadd.f32 0.0, %v341
  %v343 = vpop.f32.mrf.mxu0
  %v344 = vpop.f32.mrf.mxu0
  %v345 = vadd.f32 0.0, %v344
  %v346 = vpop.f32.mrf.mxu0
  %347 = vmatprep.mubr.bf16.mxu0 0
  %348 = vmatmul.mubr.bf16.gmra.mxu0 %v284
  %v349 = vpop.f32.mrf.mxu0
  %v350 = vadd.f32 0.0, %v349
  %v351 = vpop.f32.mrf.mxu0
  %v352 = vpop.f32.mrf.mxu0
  %v353 = vadd.f32 0.0, %v352
  %v354 = vpop.f32.mrf.mxu0
  %355 = vmatprep.mubr.bf16.mxu0 0
  %356 = vmatmul.mubr.bf16.gmra.mxu0 %v287
  %v357 = vpop.f32.mrf.mxu0
  %v358 = vadd.f32 0.0, %v357
  %v359 = vpop.f32.mrf.mxu0
  %v360 = vpop.f32.mrf.mxu0
  %v361 = vadd.f32 0.0, %v360
  %v362 = vpop.f32.mrf.mxu0
  %363 = vmatprep.mubr.bf16.mxu0 0
  %364 = vmatmul.mubr.bf16.gmra.mxu0 %v290
  %v365 = vpop.f32.mrf.mxu0
  %v366 = vadd.f32 0.0, %v365
  %v367 = vpop.f32.mrf.mxu0
  %v368 = vpop.f32.mrf.mxu0
  %v369 = vadd.f32 0.0, %v368
  %v370 = vpop.f32.mrf.mxu0
  %371 = vmatprep.mubr.bf16.mxu0 0
  %372 = vmatmul.mubr.bf16.gmra.mxu0 %v293
  %v373 = vpop.f32.mrf.mxu0
  %v374 = vadd.f32 0.0, %v373
  %v375 = vpop.f32.mrf.mxu0
  %v376 = vpop.f32.mrf.mxu0
  %v377 = vadd.f32 0.0, %v376
  %v378 = vpop.f32.mrf.mxu0
  %379 = vmatprep.mubr.bf16.mxu0 0
  %380 = vmatmul.mubr.bf16.gmra.mxu0 %v296
  %v381 = vpop.f32.mrf.mxu0
  %v382 = vadd.f32 0.0, %v381
  %v383 = vpop.f32.mrf.mxu0
  %v384 = vpop.f32.mrf.mxu0
  %v385 = vadd.f32 0.0, %v384
  %v386 = vpop.f32.mrf.mxu0
  %387 = vmatprep.mubr.bf16.mxu0 0
  %388 = vmatmul.mubr.bf16.gmra.mxu0 %v299
  %v389 = vpop.f32.mrf.mxu0
  %v390 = vadd.f32 0.0, %v389
  %v391 = vpop.f32.mrf.mxu0
  %v392 = vpop.f32.mrf.mxu0
  %v393 = vadd.f32 0.0, %v392
  %v394 = vpop.f32.mrf.mxu0
  %395 = vmatprep.mubr.bf16.mxu0 0
  %396 = vmatmul.mubr.bf16.gmra.mxu0 %v302
  %v397 = vpop.f32.mrf.mxu0
  %v398 = vadd.f32 0.0, %v397
  %v399 = vpop.f32.mrf.mxu0
  %v400 = vpop.f32.mrf.mxu0
  %v401 = vadd.f32 0.0, %v400
  %v402 = vpop.f32.mrf.mxu0
  %403 = vdwg.mxu0
  %404 = vst [vmem:[%s4] sm:$0xff] %v160
  %405 = vst [vmem:[%s4 + $0x8] sm:$0xff] %v163
  %406 = vst [vmem:[%s4 + $0x10] sm:$0xff] %v168
  %407 = vst [vmem:[%s4 + $0x18] sm:$0xff] %v171
  %408 = vst [vmem:[%s4 + $0x20] sm:$0xff] %v176
  %409 = vst [vmem:[%s4 + $0x28] sm:$0xff] %v179
  %410 = vst [vmem:[%s4 + $0x30] sm:$0xff] %v184
  %411 = vst [vmem:[%s4 + $0x38] sm:$0xff] %v187
  %412 = vst [vmem:[%s4 + $0x40] sm:$0xff] %v192
  %413 = vst [vmem:[%s4 + $0x48] sm:$0xff] %v195
  %414 = vst [vmem:[%s4 + $0x50] sm:$0xff] %v200
  %415 = vst [vmem:[%s4 + $0x58] sm:$0xff] %v203
  %416 = vst [vmem:[%s4 + $0x60] sm:$0xff] %v208
  %417 = vst [vmem:[%s4 + $0x68] sm:$0xff] %v211
  %418 = vst [vmem:[%s4 + $0x70] sm:$0xff] %v216
  %419 = vst [vmem:[%s4 + $0x78] sm:$0xff] %v219
  %v420 = vadd.f32 %v160, %v163
  %v421 = vadd.f32 %v420, %v168
  %v422 = vadd.f32 %v421, %v171
  %v423 = vadd.f32 %v422, %v176
  %v424 = vadd.f32 %v423, %v179
  %v425 = vadd.f32 %v424, %v184
  %v426 = vadd.f32 %v425, %v187
  %v427 = vadd.f32 %v426, %v192
  %v428 = vadd.f32 %v427, %v195
  %v429 = vadd.f32 %v428, %v200
  %v430 = vadd.f32 %v429, %v203
  %v431 = vadd.f32 %v430, %v208
  %v432 = vadd.f32 %v431, %v211
  %v433 = vadd.f32 %v432, %v216
  %v434 = vadd.f32 %v433, %v219
  %v435 = vrot.slane %v434, 4
  %v436 = vadd.f32 %v434, %v435
  %v437 = vrot.slane %v436, 2
  %v438 = vadd.f32 %v436, %v437
  %v439 = vrot.slane %v438, 1
  %v440 = vadd.f32 %v438, %v439
  %v441 = vmul.f32 %v160, %v160
  %v442 = vmul.f32 %v163, %v163
  %v443 = vmul.f32 %v168, %v168
  %v444 = vmul.f32 %v171, %v171
  %v445 = vmul.f32 %v176, %v176
  %v446 = vmul.f32 %v179, %v179
  %v447 = vmul.f32 %v184, %v184
  %v448 = vmul.f32 %v187, %v187
  %v449 = vmul.f32 %v192, %v192
  %v450 = vmul.f32 %v195, %v195
  %v451 = vmul.f32 %v200, %v200
  %v452 = vmul.f32 %v203, %v203
  %v453 = vmul.f32 %v208, %v208
  %v454 = vmul.f32 %v211, %v211
  %v455 = vmul.f32 %v216, %v216
  %v456 = vmul.f32 %v219, %v219
  %v457 = vadd.f32 %v441, %v442
  %v458 = vadd.f32 %v457, %v443
  %v459 = vadd.f32 %v458, %v444
  %v460 = vadd.f32 %v459, %v445
  %v461 = vadd.f32 %v460, %v446
  %v462 = vadd.f32 %v461, %v447
  %v463 = vadd.f32 %v462, %v448
  %v464 = vadd.f32 %v463, %v449
  %v465 = vadd.f32 %v464, %v450
  %v466 = vadd.f32 %v465, %v451
  %v467 = vadd.f32 %v466, %v452
  %v468 = vadd.f32 %v467, %v453
  %v469 = vadd.f32 %v468, %v454
  %v470 = vadd.f32 %v469, %v455
  %v471 = vadd.f32 %v470, %v456
  %v472 = vrot.slane %v471, 4
  %v473 = vadd.f32 %v471, %v472
  %v474 = vrot.slane %v473, 2
  %v475 = vadd.f32 %v473, %v474
  %v476 = vrot.slane %v475, 1
  %v477 = vadd.f32 %v475, %v476
  %v478 = vadd.f32 %v342, %v345
  %v479 = vadd.f32 %v478, %v350
  %v480 = vadd.f32 %v479, %v353
  %v481 = vadd.f32 %v480, %v358
  %v482 = vadd.f32 %v481, %v361
  %v483 = vadd.f32 %v482, %v366
  %v484 = vadd.f32 %v483, %v369
  %v485 = vadd.f32 %v484, %v374
  %v486 = vadd.f32 %v485, %v377
  %v487 = vadd.f32 %v486, %v382
  %v488 = vadd.f32 %v487, %v385
  %v489 = vadd.f32 %v488, %v390
  %v490 = vadd.f32 %v489, %v393
  %v491 = vadd.f32 %v490, %v398
  %v492 = vadd.f32 %v491, %v401
  %v493 = vrot.slane %v492, 4
  %v494 = vadd.f32 %v492, %v493
  %v495 = vrot.slane %v494, 2
  %v496 = vadd.f32 %v494, %v495
  %v497 = vrot.slane %v496, 1
  %v498 = vadd.f32 %v496, %v497
  %v499 = vmul.f32 %v342, %v342
  %v500 = vmul.f32 %v345, %v345
  %v501 = vmul.f32 %v350, %v350
  %v502 = vmul.f32 %v353, %v353
  %v503 = vmul.f32 %v358, %v358
  %v504 = vmul.f32 %v361, %v361
  %v505 = vmul.f32 %v366, %v366
  %v506 = vmul.f32 %v369, %v369
  %v507 = vmul.f32 %v374, %v374
  %v508 = vmul.f32 %v377, %v377
  %v509 = vmul.f32 %v382, %v382
  %v510 = vmul.f32 %v385, %v385
  %v511 = vmul.f32 %v390, %v390
  %v512 = vmul.f32 %v393, %v393
  %v513 = vmul.f32 %v398, %v398
  %v514 = vmul.f32 %v401, %v401
  %v515 = vadd.f32 %v499, %v500
  %v516 = vadd.f32 %v515, %v501
  %v517 = vadd.f32 %v516, %v502
  %v518 = vadd.f32 %v517, %v503
  %v519 = vadd.f32 %v518, %v504
  %v520 = vadd.f32 %v519, %v505
  %v521 = vadd.f32 %v520, %v506
  %v522 = vadd.f32 %v521, %v507
  %v523 = vadd.f32 %v522, %v508
  %v524 = vadd.f32 %v523, %v509
  %v525 = vadd.f32 %v524, %v510
  %v526 = vadd.f32 %v525, %v511
  %v527 = vadd.f32 %v526, %v512
  %v528 = vadd.f32 %v527, %v513
  %v529 = vadd.f32 %v528, %v514
  %v530 = vrot.slane %v529, 4
  %v531 = vadd.f32 %v529, %v530
  %v532 = vrot.slane %v531, 2
  %v533 = vadd.f32 %v531, %v532
  %v534 = vrot.slane %v533, 1
  %v535 = vadd.f32 %v533, %v534
  %vm536 = vcmask 1040384
  %v537 = vsel %vm536, %v440, %v477
  %vm538 = vcmask 1041408
  %v539 = vsel %vm538, %v537, %v498
  %vm540 = vcmask 1042432
  %v541 = vsel %vm540, %v539, %v535
  %542 = vst [vmem:[%s5] sm:$0xf] %v541
  // Predicated region
  $region18: #{residual_block_forward.4} parent=0 // pred_check
    _
  $region19: #{residual_block_forward.4} parent=0 // pred_check_branch
    %544 = sbr.rel (0) target = $region21
  $region20: #{residual_block_forward.4} parent=0 // pred_region
    _
  $region21: #{residual_block_forward.4} parent=0 // pred_fallthru
    _
  // Predicated region
  $region22: #{residual_block_forward.4} parent=0 // pred_check
    _
  $region23: #{residual_block_forward.4} parent=0 // pred_check_branch
    %546 = sbr.rel (0) target = $region25
  $region24: #{residual_block_forward.4} parent=0 // pred_region
    _
  $region25: #{residual_block_forward.4} parent=0 // pred_fallthru
    _
  // Predicated region
  $region26: #{residual_block_forward.4} parent=0 // pred_check
    _
  $region27: #{residual_block_forward.4} parent=0 // pred_check_branch
    %548 = sbr.rel (0) target = $region29
  $region28: #{residual_block_forward.4} parent=0 // pred_region
    _
  $region29: #{residual_block_forward.4} parent=0 // pred_fallthru
    _
  // Predicated region
  $region30: #{residual_block_forward.4} parent=0 // pred_check
    _
  $region31: #{residual_block_forward.4} parent=0 // pred_check_branch
    %550 = sbr.rel (0) target = $region33
  $region32: #{residual_block_forward.4} parent=0 // pred_region
    _
  $region33: #{residual_block_forward.4} parent=0 // pred_fallthru
    _

// kernel: residual_block_forward.6
$region0: #{residual_block_forward.6}
  #allocation0 [shape = 'u32[]', space=smem, size = 0x4, offset = 0x4, fixed_abs, tag = 'smem constant byte address 0x4 - core index']
  #allocation1 [shape = 'u32[144,128]{1,0:T(1,128)}', space=vmem, size = 0x12000, scoped, tag = 'internal scratch']
  %s0 = inlined_call_operand.vmem [shape: bf16[128,72], index: 0, kind: input, shape index: {}]
  %s1 = inlined_call_operand.vmem [shape: bf16[72,128], index: 1, kind: input, shape index: {}]
  %s2 = inlined_call_operand.vmem [shape: f32[128,128], index: 2, kind: output, shape index: {0}]
  %s3 = inlined_call_operand.vmem [shape: f32[1,2,128], index: 3, kind: output, shape index: {1}]
  %4 = xla_tuple %s2, %s3
  %s5 = sld [smem:[#allocation0]]
  $region26: #{residual_block_forward.6} parent=0
    _
  %s7 = ssub.s32 1, %s5
  %s8 = scalar_select 0, %s7, %s5
  // Predicated region
  $region2: #{residual_block_forward.6} parent=0 // pred_check
    _
  $region3: #{residual_block_forward.6} parent=0 // pred_check_branch
    %10 = sbr.rel (0) target = $region5
  $region4: #{residual_block_forward.6} parent=0 // pred_region
    _
  $region5: #{residual_block_forward.6} parent=0 // pred_fallthru
    _
  // Predicated region
  $region6: #{residual_block_forward.6} parent=0 // pred_check
    _
  $region7: #{residual_block_forward.6} parent=0 // pred_check_branch
    %12 = sbr.rel (0) target = $region9
  $region8: #{residual_block_forward.6} parent=0 // pred_region
    _
  $region9: #{residual_block_forward.6} parent=0 // pred_fallthru
    _
  %v14 = vld [vmem:[%s0] sm:$0xf]
  %v15 = vld [vmem:[%s0 + $0x4] sm:$0xf]
  %v16 = vld [vmem:[%s0 + $0x8] sm:$0xf]
  %v17 = vld [vmem:[%s0 + $0xc] sm:$0xf]
  %v18 = vld [vmem:[%s0 + $0x10] sm:$0xf]
  %v19 = vld [vmem:[%s0 + $0x14] sm:$0xf]
  %v20 = vld [vmem:[%s0 + $0x18] sm:$0xf]
  %v21 = vld [vmem:[%s0 + $0x1c] sm:$0xf]
  %v22 = vld [vmem:[%s0 + $0x20] sm:$0xf]
  %v23 = vld [vmem:[%s0 + $0x24] sm:$0xf]
  %v24 = vld [vmem:[%s0 + $0x28] sm:$0xf]
  %v25 = vld [vmem:[%s0 + $0x2c] sm:$0xf]
  %v26 = vld [vmem:[%s0 + $0x30] sm:$0xf]
  %v27 = vld [vmem:[%s0 + $0x34] sm:$0xf]
  %v28 = vld [vmem:[%s0 + $0x38] sm:$0xf]
  %v29 = vld [vmem:[%s0 + $0x3c] sm:$0xf]
  %v30 = vld [vmem:[%s1] sm:$0xf]
  %v31 = vld [vmem:[%s1 + $0x4] sm:$0xf]
  %v32 = vld [vmem:[%s1 + $0x8] sm:$0xf]
  %v33 = vld [vmem:[%s1 + $0xc] sm:$0xf]
  %v34 = vld [vmem:[%s1 + $0x10] sm:$0xf]
  %v35 = vld [vmem:[%s1 + $0x14] sm:$0xf]
  %v36 = vld [vmem:[%s1 + $0x18] sm:$0xf]
  %v37 = vld [vmem:[%s1 + $0x1c] sm:$0xf]
  %v38 = vld [vmem:[%s1 + $0x20] sm:$0xf]
  %v55 = vunpack.c.l.b16 %v14
  %v56 = vunpack.c.l.b16 %v15
  %v57 = vunpack.c.l.b16 %v16
  %v58 = vunpack.c.l.b16 %v17
  %v59 = vunpack.c.l.b16 %v18
  %v60 = vunpack.c.l.b16 %v19
  %v61 = vunpack.c.l.b16 %v20
  %v62 = vunpack.c.l.b16 %v21
  %v63 = vunpack.c.l.b16 %v22
  %v64 = vunpack.c.l.b16 %v23
  %v65 = vunpack.c.l.b16 %v24
  %v66 = vunpack.c.l.b16 %v25
  %v67 = vunpack.c.l.b16 %v26
  %v68 = vunpack.c.l.b16 %v27
  %v69 = vunpack.c.l.b16 %v28
  %v70 = vunpack.c.l.b16 %v29
  %v71 = vpack.c.b16 %v56, %v55
  %v72 = vpack.c.b16 %v58, %v57
  %v73 = vpack.c.b16 %v60, %v59
  %v74 = vpack.c.b16 %v62, %v61
  %v75 = vpack.c.b16 %v64, %v63
  %v76 = vpack.c.b16 %v66, %v65
  %v77 = vpack.c.b16 %v68, %v67
  %v78 = vpack.c.b16 %v70, %v69
  %v88 = vunpack.c.l.b16 %v30
  %v89 = vunpack.c.l.b16 %v31
  %v90 = vunpack.c.l.b16 %v32
  %v91 = vunpack.c.l.b16 %v33
  %v92 = vunpack.c.l.b16 %v34
  %v93 = vunpack.c.l.b16 %v35
  %v94 = vunpack.c.l.b16 %v36
  %v95 = vunpack.c.l.b16 %v37
  %v96 = vunpack.c.l.b16 %v38
  %v97 = vpack.c.b16 %v89, %v88
  %v98 = vpack.c.b16 %v91, %v90
  %v99 = vpack.c.b16 %v93, %v92
  %v100 = vpack.c.b16 %v95, %v94
  %v101 = vpack.c.b16 %v96, %v96
  %vm106 = vcmask 588800
  %v108 = vsel %vm106, %v71, 0
  %v111 = vsel %vm106, %v72, 0
  %v114 = vsel %vm106, %v73, 0
  %v117 = vsel %vm106, %v74, 0
  %v120 = vsel %vm106, %v75, 0
  %v123 = vsel %vm106, %v76, 0
  %v126 = vsel %vm106, %v77, 0
  %v129 = vsel %vm106, %v78, 0
  %vm131 = vcmask 1043456
  %v133 = vsel %vm131, %v101, 0
  %135 = vmatprep.subr.bf16.mxu0 0
  %136 = vmatpush1.bf16.msra.mxu0 0
  %137 = vmatprep.subr.bf16.mxu0 0
  %138 = vmatpush1.bf16.msra.mxu0 0
  %139 = vmatprep.subr.bf16.mxu0 0
  %140 = vmatpush1.bf16.msra.mxu0 0
  %141 = vmatprep.subr.bf16.mxu0 0
  %142 = vmatpush1.bf16.msra.mxu0 %v133
  %143 = vmatprep.subr.bf16.mxu0 0
  %144 = vmatpush1.bf16.msra.mxu0 %v100
  %145 = vmatprep.subr.bf16.mxu0 0
  %146 = vmatpush1.bf16.msra.mxu0 %v99
  %147 = vmatprep.subr.bf16.mxu0 0
  %148 = vmatpush1.bf16.msra.mxu0 %v98
  %149 = vmatprep.subr.bf16.mxu0 0
  %150 = vmatpush1.bf16.msra.mxu0 %v97
  %151 = vmatprep.subr.bf16.mxu0 0
  %152 = vmatpush2.bf16.msra.mxu0 0
  %153 = vmatprep.subr.bf16.mxu0 0
  %154 = vmatpush2.bf16.msra.mxu0 0
  %155 = vmatprep.subr.bf16.mxu0 0
  %156 = vmatpush2.bf16.msra.mxu0 0
  %157 = vmatprep.subr.bf16.mxu0 0
  %158 = vmatpush2.bf16.msra.mxu0 0
  %159 = vmatprep.subr.bf16.mxu0 0
  %160 = vmatpush2.bf16.msra.mxu0 0
  %161 = vmatprep.subr.bf16.mxu0 0
  %162 = vmatpush2.bf16.msra.mxu0 0
  %163 = vmatprep.subr.bf16.mxu0 0
  %164 = vmatpush2.bf16.msra.mxu0 0
  %165 = vmatprep.subr.bf16.mxu0 0
  %166 = vmatpush2.bf16.msra.mxu0 0
  %167 = vmatprep.mubr.bf16.mxu0 0
  %168 = vmatmul.mubr.bf16.gmra.mxu0 %v108
  %v169 = vpop.f32.mrf.mxu0
  %v170 = vadd.f32 0.0, %v169
  %v171 = vpop.f32.mrf.mxu0
  %v172 = vpop.f32.mrf.mxu0
  %v173 = vadd.f32 0.0, %v172
  %v174 = vpop.f32.mrf.mxu0
  %175 = vmatprep.mubr.bf16.mxu0 0
  %176 = vmatmul.mubr.bf16.gmra.mxu0 %v111
  %v177 = vpop.f32.mrf.mxu0
  %v178 = vadd.f32 0.0, %v177
  %v179 = vpop.f32.mrf.mxu0
  %v180 = vpop.f32.mrf.mxu0
  %v181 = vadd.f32 0.0, %v180
  %v182 = vpop.f32.mrf.mxu0
  %183 = vmatprep.mubr.bf16.mxu0 0
  %184 = vmatmul.mubr.bf16.gmra.mxu0 %v114
  %v185 = vpop.f32.mrf.mxu0
  %v186 = vadd.f32 0.0, %v185
  %v187 = vpop.f32.mrf.mxu0
  %v188 = vpop.f32.mrf.mxu0
  %v189 = vadd.f32 0.0, %v188
  %v190 = vpop.f32.mrf.mxu0
  %191 = vmatprep.mubr.bf16.mxu0 0
  %192 = vmatmul.mubr.bf16.gmra.mxu0 %v117
  %v193 = vpop.f32.mrf.mxu0
  %v194 = vadd.f32 0.0, %v193
  %v195 = vpop.f32.mrf.mxu0
  %v196 = vpop.f32.mrf.mxu0
  %v197 = vadd.f32 0.0, %v196
  %v198 = vpop.f32.mrf.mxu0
  %199 = vmatprep.mubr.bf16.mxu0 0
  %200 = vmatmul.mubr.bf16.gmra.mxu0 %v120
  %v201 = vpop.f32.mrf.mxu0
  %v202 = vadd.f32 0.0, %v201
  %v203 = vpop.f32.mrf.mxu0
  %v204 = vpop.f32.mrf.mxu0
  %v205 = vadd.f32 0.0, %v204
  %v206 = vpop.f32.mrf.mxu0
  %207 = vmatprep.mubr.bf16.mxu0 0
  %208 = vmatmul.mubr.bf16.gmra.mxu0 %v123
  %v209 = vpop.f32.mrf.mxu0
  %v210 = vadd.f32 0.0, %v209
  %v211 = vpop.f32.mrf.mxu0
  %v212 = vpop.f32.mrf.mxu0
  %v213 = vadd.f32 0.0, %v212
  %v214 = vpop.f32.mrf.mxu0
  %215 = vmatprep.mubr.bf16.mxu0 0
  %216 = vmatmul.mubr.bf16.gmra.mxu0 %v126
  %v217 = vpop.f32.mrf.mxu0
  %v218 = vadd.f32 0.0, %v217
  %v219 = vpop.f32.mrf.mxu0
  %v220 = vpop.f32.mrf.mxu0
  %v221 = vadd.f32 0.0, %v220
  %v222 = vpop.f32.mrf.mxu0
  %223 = vmatprep.mubr.bf16.mxu0 0
  %224 = vmatmul.mubr.bf16.gmra.mxu0 %v129
  %v225 = vpop.f32.mrf.mxu0
  %v226 = vadd.f32 0.0, %v225
  %v227 = vpop.f32.mrf.mxu0
  %v228 = vpop.f32.mrf.mxu0
  %v229 = vadd.f32 0.0, %v228
  %v230 = vpop.f32.mrf.mxu0
  %231 = vdwg.mxu0
  %232 = vst [vmem:[%s2] sm:$0xff] %v170
  %233 = vst [vmem:[%s2 + $0x8] sm:$0xff] %v173
  %234 = vst [vmem:[%s2 + $0x10] sm:$0xff] %v178
  %235 = vst [vmem:[%s2 + $0x18] sm:$0xff] %v181
  %236 = vst [vmem:[%s2 + $0x20] sm:$0xff] %v186
  %237 = vst [vmem:[%s2 + $0x28] sm:$0xff] %v189
  %238 = vst [vmem:[%s2 + $0x30] sm:$0xff] %v194
  %239 = vst [vmem:[%s2 + $0x38] sm:$0xff] %v197
  %240 = vst [vmem:[%s2 + $0x40] sm:$0xff] %v202
  %241 = vst [vmem:[%s2 + $0x48] sm:$0xff] %v205
  %242 = vst [vmem:[%s2 + $0x50] sm:$0xff] %v210
  %243 = vst [vmem:[%s2 + $0x58] sm:$0xff] %v213
  %244 = vst [vmem:[%s2 + $0x60] sm:$0xff] %v218
  %245 = vst [vmem:[%s2 + $0x68] sm:$0xff] %v221
  %246 = vst [vmem:[%s2 + $0x70] sm:$0xff] %v226
  %247 = vst [vmem:[%s2 + $0x78] sm:$0xff] %v229
  %v248 = vadd.f32 %v170, %v173
  %v249 = vadd.f32 %v248, %v178
  %v250 = vadd.f32 %v249, %v181
  %v251 = vadd.f32 %v250, %v186
  %v252 = vadd.f32 %v251, %v189
  %v253 = vadd.f32 %v252, %v194
  %v254 = vadd.f32 %v253, %v197
  %v255 = vadd.f32 %v254, %v202
  %v256 = vadd.f32 %v255, %v205
  %v257 = vadd.f32 %v256, %v210
  %v258 = vadd.f32 %v257, %v213
  %v259 = vadd.f32 %v258, %v218
  %v260 = vadd.f32 %v259, %v221
  %v261 = vadd.f32 %v260, %v226
  %v262 = vadd.f32 %v261, %v229
  %v263 = vrot.slane %v262, 4
  %v264 = vadd.f32 %v262, %v263
  %v265 = vrot.slane %v264, 2
  %v266 = vadd.f32 %v264, %v265
  %v267 = vrot.slane %v266, 1
  %v268 = vadd.f32 %v266, %v267
  %v269 = vmul.f32 %v170, %v170
  %v270 = vmul.f32 %v173, %v173
  %v271 = vmul.f32 %v178, %v178
  %v272 = vmul.f32 %v181, %v181
  %v273 = vmul.f32 %v186, %v186
  %v274 = vmul.f32 %v189, %v189
  %v275 = vmul.f32 %v194, %v194
  %v276 = vmul.f32 %v197, %v197
  %v277 = vmul.f32 %v202, %v202
  %v278 = vmul.f32 %v205, %v205
  %v279 = vmul.f32 %v210, %v210
  %v280 = vmul.f32 %v213, %v213
  %v281 = vmul.f32 %v218, %v218
  %v282 = vmul.f32 %v221, %v221
  %v283 = vmul.f32 %v226, %v226
  %v284 = vmul.f32 %v229, %v229
  %v285 = vadd.f32 %v269, %v270
  %v286 = vadd.f32 %v285, %v271
  %v287 = vadd.f32 %v286, %v272
  %v288 = vadd.f32 %v287, %v273
  %v289 = vadd.f32 %v288, %v274
  %v290 = vadd.f32 %v289, %v275
  %v291 = vadd.f32 %v290, %v276
  %v292 = vadd.f32 %v291, %v277
  %v293 = vadd.f32 %v292, %v278
  %v294 = vadd.f32 %v293, %v279
  %v295 = vadd.f32 %v294, %v280
  %v296 = vadd.f32 %v295, %v281
  %v297 = vadd.f32 %v296, %v282
  %v298 = vadd.f32 %v297, %v283
  %v299 = vadd.f32 %v298, %v284
  %v300 = vrot.slane %v299, 4
  %v301 = vadd.f32 %v299, %v300
  %v302 = vrot.slane %v301, 2
  %v303 = vadd.f32 %v301, %v302
  %v304 = vrot.slane %v303, 1
  %v305 = vadd.f32 %v303, %v304
  %vm306 = vcmask 1040384
  %v307 = vsel %vm306, %v268, %v305
  %308 = vst [vmem:[%s3] sm:$0x3] %v307
  // Predicated region
  $region10: #{residual_block_forward.6} parent=0 // pred_check
    _
  $region11: #{residual_block_forward.6} parent=0 // pred_check_branch
    %310 = sbr.rel (0) target = $region13
  $region12: #{residual_block_forward.6} parent=0 // pred_region
    _
  $region13: #{residual_block_forward.6} parent=0 // pred_fallthru
    _
  // Predicated region
  $region14: #{residual_block_forward.6} parent=0 // pred_check
    _
  $region15: #{residual_block_forward.6} parent=0 // pred_check_branch
    %312 = sbr.rel (0) target = $region17
  $region16: #{residual_block_forward.6} parent=0 // pred_region
    _
  $region17: #{residual_block_forward.6} parent=0 // pred_fallthru
    _
  // Predicated region
  $region18: #{residual_block_forward.6} parent=0 // pred_check
    _
  $region19: #{residual_block_forward.6} parent=0 // pred_check_branch
    %314 = sbr.rel (0) target = $region21
  $region20: #{residual_block_forward.6} parent=0 // pred_region
    _
  $region21: #{residual_block_forward.6} parent=0 // pred_fallthru
    _
  // Predicated region
  $region22: #{residual_block_forward.6} parent=0 // pred_check
    _
  $region23: #{residual_block_forward.6} parent=0 // pred_check_branch
    %316 = sbr.rel (0) target = $region25
  $region24: #{residual_block_forward.6} parent=0 // pred_region
    _
  $region25: #{residual_block_forward.6} parent=0 // pred_fallthru
    _

// kernel: residual_block_forward.7
$region0: #{residual_block_forward.7}
  #allocation0 [shape = 'u32[]', space=smem, size = 0x4, offset = 0x4, fixed_abs, tag = 'smem constant byte address 0x4 - core index']
  #allocation1 [shape = 'u32[144,128]{1,0:T(1,128)}', space=vmem, size = 0x12000, scoped, tag = 'internal scratch']
  %s0 = inlined_call_operand.vmem [shape: f32[128,128], index: 0, kind: input, shape index: {}, may-alias: {0,7}]
  %s1 = inlined_call_operand.vmem [shape: f32[1,128], index: 1, kind: input, shape index: {}]
  %s2 = inlined_call_operand.vmem [shape: f32[1,128], index: 2, kind: input, shape index: {}]
  %s3 = inlined_call_operand.vmem [shape: bf16[128,8], index: 3, kind: input, shape index: {}]
  %s4 = inlined_call_operand.vmem [shape: bf16[8,128], index: 4, kind: input, shape index: {}]
  %s5 = inlined_call_operand.vmem [shape: f32[1,128], index: 5, kind: input, shape index: {}]
  %s6 = inlined_call_operand.vmem [shape: f32[1,128], index: 6, kind: input, shape index: {}]
  %s7 = inlined_call_operand.vmem [shape: f32[128,128], index: 7, kind: output, shape index: {}, may-alias: {0,7}]
  %s8 = sld [smem:[#allocation0]]
  $region38: #{residual_block_forward.7} parent=0
    _
  %s10 = ssub.s32 1, %s8
  %s11 = scalar_select 0, %s10, %s8
  // Predicated region
  $region2: #{residual_block_forward.7} parent=0 // pred_check
    _
  $region3: #{residual_block_forward.7} parent=0 // pred_check_branch
    %13 = sbr.rel (0) target = $region5
  $region4: #{residual_block_forward.7} parent=0 // pred_region
    _
  $region5: #{residual_block_forward.7} parent=0 // pred_fallthru
    _
  // Predicated region
  $region6: #{residual_block_forward.7} parent=0 // pred_check
    _
  $region7: #{residual_block_forward.7} parent=0 // pred_check_branch
    %15 = sbr.rel (0) target = $region9
  $region8: #{residual_block_forward.7} parent=0 // pred_region
    _
  $region9: #{residual_block_forward.7} parent=0 // pred_fallthru
    _
  // Predicated region
  $region10: #{residual_block_forward.7} parent=0 // pred_check
    _
  $region11: #{residual_block_forward.7} parent=0 // pred_check_branch
    %17 = sbr.rel (0) target = $region13
  $region12: #{residual_block_forward.7} parent=0 // pred_region
    _
  $region13: #{residual_block_forward.7} parent=0 // pred_fallthru
    _
  // Predicated region
  $region14: #{residual_block_forward.7} parent=0 // pred_check
    _
  $region15: #{residual_block_forward.7} parent=0 // pred_check_branch
    %19 = sbr.rel (0) target = $region17
  $region16: #{residual_block_forward.7} parent=0 // pred_region
    _
  $region17: #{residual_block_forward.7} parent=0 // pred_fallthru
    _
  // Predicated region
  $region18: #{residual_block_forward.7} parent=0 // pred_check
    _
  $region19: #{residual_block_forward.7} parent=0 // pred_check_branch
    %21 = sbr.rel (0) target = $region21
  $region20: #{residual_block_forward.7} parent=0 // pred_region
    _
  $region21: #{residual_block_forward.7} parent=0 // pred_fallthru
    _
  // Predicated region
  $region22: #{residual_block_forward.7} parent=0 // pred_check
    _
  $region23: #{residual_block_forward.7} parent=0 // pred_check_branch
    %23 = sbr.rel (0) target = $region25
  $region24: #{residual_block_forward.7} parent=0 // pred_region
    _
  $region25: #{residual_block_forward.7} parent=0 // pred_fallthru
    _
  // Predicated region
  $region26: #{residual_block_forward.7} parent=0 // pred_check
    _
  $region27: #{residual_block_forward.7} parent=0 // pred_check_branch
    %25 = sbr.rel (0) target = $region29
  $region28: #{residual_block_forward.7} parent=0 // pred_region
    _
  $region29: #{residual_block_forward.7} parent=0 // pred_fallthru
    _
  %v27 = vld [vmem:[%s3] sm:$0xf]
  %v28 = vld [vmem:[%s3 + $0x4] sm:$0xf]
  %v29 = vld [vmem:[%s3 + $0x8] sm:$0xf]
  %v30 = vld [vmem:[%s3 + $0xc] sm:$0xf]
  %v31 = vld [vmem:[%s3 + $0x10] sm:$0xf]
  %v32 = vld [vmem:[%s3 + $0x14] sm:$0xf]
  %v33 = vld [vmem:[%s3 + $0x18] sm:$0xf]
  %v34 = vld [vmem:[%s3 + $0x1c] sm:$0xf]
  %v35 = vld [vmem:[%s3 + $0x20] sm:$0xf]
  %v36 = vld [vmem:[%s3 + $0x24] sm:$0xf]
  %v37 = vld [vmem:[%s3 + $0x28] sm:$0xf]
  %v38 = vld [vmem:[%s3 + $0x2c] sm:$0xf]
  %v39 = vld [vmem:[%s3 + $0x30] sm:$0xf]
  %v40 = vld [vmem:[%s3 + $0x34] sm:$0xf]
  %v41 = vld [vmem:[%s3 + $0x38] sm:$0xf]
  %v42 = vld [vmem:[%s3 + $0x3c] sm:$0xf]
  %v43 = vld [vmem:[%s4] sm:$0xf]
  %v60 = vunpack.c.l.b16 %v27
  %v61 = vunpack.c.l.b16 %v28
  %v62 = vunpack.c.l.b16 %v29
  %v63 = vunpack.c.l.b16 %v30
  %v64 = vunpack.c.l.b16 %v31
  %v65 = vunpack.c.l.b16 %v32
  %v66 = vunpack.c.l.b16 %v33
  %v67 = vunpack.c.l.b16 %v34
  %v68 = vunpack.c.l.b16 %v35
  %v69 = vunpack.c.l.b16 %v36
  %v70 = vunpack.c.l.b16 %v37
  %v71 = vunpack.c.l.b16 %v38
  %v72 = vunpack.c.l.b16 %v39
  %v73 = vunpack.c.l.b16 %v40
  %v74 = vunpack.c.l.b16 %v41
  %v75 = vunpack.c.l.b16 %v42
  %v76 = vpack.c.b16 %v61, %v60
  %v77 = vpack.c.b16 %v63, %v62
  %v78 = vpack.c.b16 %v65, %v64
  %v79 = vpack.c.b16 %v67, %v66
  %v80 = vpack.c.b16 %v69, %v68
  %v81 = vpack.c.b16 %v71, %v70
  %v82 = vpack.c.b16 %v73, %v72
  %v83 = vpack.c.b16 %v75, %v74
  %vm84 = vcmask 64512
  %v86 = vsel %vm84, %v76, 0
  %v89 = vsel %vm84, %v77, 0
  %v92 = vsel %vm84, %v78, 0
  %v95 = vsel %vm84, %v79, 0
  %v98 = vsel %vm84, %v80, 0
  %v101 = vsel %vm84, %v81, 0
  %v104 = vsel %vm84, %v82, 0
  %v107 = vsel %vm84, %v83, 0
  %vm109 = vcmask 1043456
  %v111 = vsel %vm109, %v43, 0
  %113 = vmatprep.subr.bf16.mxu0 0
  %114 = vmatpush1.bf16.msra.mxu0 0
  %115 = vmatprep.subr.bf16.mxu0 0
  %116 = vmatpush1.bf16.msra.mxu0 0
  %117 = vmatprep.subr.bf16.mxu0 0
  %118 = vmatpush1.bf16.msra.mxu0 0
  %119 = vmatprep.subr.bf16.mxu0 0
  %120 = vmatpush1.bf16.msra.mxu0 0
  %121 = vmatprep.subr.bf16.mxu0 0
  %122 = vmatpush1.bf16.msra.mxu0 0
  %123 = vmatprep.subr.bf16.mxu0 0
  %124 = vmatpush1.bf16.msra.mxu0 0
  %125 = vmatprep.subr.bf16.mxu0 0
  %126 = vmatpush1.bf16.msra.mxu0 0
  %127 = vmatprep.subr.bf16.mxu0 0
  %128 = vmatpush1.bf16.msra.mxu0 %v111
  %129 = vmatprep.subr.bf16.mxu0 0
  %130 = vmatpush2.bf16.msra.mxu0 0
  %131 = vmatprep.subr.bf16.mxu0 0
  %132 = vmatpush2.bf16.msra.mxu0 0
  %133 = vmatprep.subr.bf16.mxu0 0
  %134 = vmatpush2.bf16.msra.mxu0 0
  %135 = vmatprep.subr.bf16.mxu0 0
  %136 = vmatpush2.bf16.msra.mxu0 0
  %137 = vmatprep.subr.bf16.mxu0 0
  %138 = vmatpush2.bf16.msra.mxu0 0
  %139 = vmatprep.subr.bf16.mxu0 0
  %140 = vmatpush2.bf16.msra.mxu0 0
  %141 = vmatprep.subr.bf16.mxu0 0
  %142 = vmatpush2.bf16.msra.mxu0 0
  %143 = vmatprep.subr.bf16.mxu0 0
  %144 = vmatpush2.bf16.msra.mxu0 0
  %145 = vmatprep.mubr.bf16.mxu0 0
  %146 = vmatmul.mubr.bf16.gmra.mxu0 %v86
  %v147 = vpop.f32.mrf.mxu0
  %v148 = vadd.f32 0.0, %v147
  %v149 = vpop.f32.mrf.mxu0
  %v150 = vpop.f32.mrf.mxu0
  %v151 = vadd.f32 0.0, %v150
  %v152 = vpop.f32.mrf.mxu0
  %153 = vmatprep.mubr.bf16.mxu0 0
  %154 = vmatmul.mubr.bf16.gmra.mxu0 %v89
  %v155 = vpop.f32.mrf.mxu0
  %v156 = vadd.f32 0.0, %v155
  %v157 = vpop.f32.mrf.mxu0
  %v158 = vpop.f32.mrf.mxu0
  %v159 = vadd.f32 0.0, %v158
  %v160 = vpop.f32.mrf.mxu0
  %161 = vmatprep.mubr.bf16.mxu0 0
  %162 = vmatmul.mubr.bf16.gmra.mxu0 %v92
  %v163 = vpop.f32.mrf.mxu0
  %v164 = vadd.f32 0.0, %v163
  %v165 = vpop.f32.mrf.mxu0
  %v166 = vpop.f32.mrf.mxu0
  %v167 = vadd.f32 0.0, %v166
  %v168 = vpop.f32.mrf.mxu0
  %169 = vmatprep.mubr.bf16.mxu0 0
  %170 = vmatmul.mubr.bf16.gmra.mxu0 %v95
  %v171 = vpop.f32.mrf.mxu0
  %v172 = vadd.f32 0.0, %v171
  %v173 = vpop.f32.mrf.mxu0
  %v174 = vpop.f32.mrf.mxu0
  %v175 = vadd.f32 0.0, %v174
  %v176 = vpop.f32.mrf.mxu0
  %177 = vmatprep.mubr.bf16.mxu0 0
  %178 = vmatmul.mubr.bf16.gmra.mxu0 %v98
  %v179 = vpop.f32.mrf.mxu0
  %v180 = vadd.f32 0.0, %v179
  %v181 = vpop.f32.mrf.mxu0
  %v182 = vpop.f32.mrf.mxu0
  %v183 = vadd.f32 0.0, %v182
  %v184 = vpop.f32.mrf.mxu0
  %185 = vmatprep.mubr.bf16.mxu0 0
  %186 = vmatmul.mubr.bf16.gmra.mxu0 %v101
  %v187 = vpop.f32.mrf.mxu0
  %v188 = vadd.f32 0.0, %v187
  %v189 = vpop.f32.mrf.mxu0
  %v190 = vpop.f32.mrf.mxu0
  %v191 = vadd.f32 0.0, %v190
  %v192 = vpop.f32.mrf.mxu0
  %193 = vmatprep.mubr.bf16.mxu0 0
  %194 = vmatmul.mubr.bf16.gmra.mxu0 %v104
  %v195 = vpop.f32.mrf.mxu0
  %v196 = vadd.f32 0.0, %v195
  %v197 = vpop.f32.mrf.mxu0
  %v198 = vpop.f32.mrf.mxu0
  %v199 = vadd.f32 0.0, %v198
  %v200 = vpop.f32.mrf.mxu0
  %201 = vmatprep.mubr.bf16.mxu0 0
  %202 = vmatmul.mubr.bf16.gmra.mxu0 %v107
  %v203 = vpop.f32.mrf.mxu0
  %v204 = vadd.f32 0.0, %v203
  %v205 = vpop.f32.mrf.mxu0
  %v206 = vpop.f32.mrf.mxu0
  %v207 = vadd.f32 0.0, %v206
  %v208 = vpop.f32.mrf.mxu0
  %209 = vdwg.mxu0
  %v210 = vld [vmem:[%s0] sm:$0xff]
  %v211 = vld [vmem:[%s0 + $0x8] sm:$0xff]
  %v212 = vld [vmem:[%s0 + $0x10] sm:$0xff]
  %v213 = vld [vmem:[%s0 + $0x18] sm:$0xff]
  %v214 = vld [vmem:[%s0 + $0x20] sm:$0xff]
  %v215 = vld [vmem:[%s0 + $0x28] sm:$0xff]
  %v216 = vld [vmem:[%s0 + $0x30] sm:$0xff]
  %v217 = vld [vmem:[%s0 + $0x38] sm:$0xff]
  %v218 = vld [vmem:[%s0 + $0x40] sm:$0xff]
  %v219 = vld [vmem:[%s0 + $0x48] sm:$0xff]
  %v220 = vld [vmem:[%s0 + $0x50] sm:$0xff]
  %v221 = vld [vmem:[%s0 + $0x58] sm:$0xff]
  %v222 = vld [vmem:[%s0 + $0x60] sm:$0xff]
  %v223 = vld [vmem:[%s0 + $0x68] sm:$0xff]
  %v224 = vld [vmem:[%s0 + $0x70] sm:$0xff]
  %v225 = vld [vmem:[%s0 + $0x78] sm:$0xff]
  %v226 = vld [vmem:[%s1] sm:$0x1]
  %v228 = vlaneseq
  %v229 = vshrl.u32 %v228, 7
  %v230 = vsub.s32 0, %v229
  %v231 = vrot.slane %v226, %v230
  %v233 = vmul.f32 %v210, %v231
  %v234 = vmul.f32 %v211, %v231
  %v235 = vmul.f32 %v212, %v231
  %v236 = vmul.f32 %v213, %v231
  %v237 = vmul.f32 %v214, %v231
  %v238 = vmul.f32 %v215, %v231
  %v239 = vmul.f32 %v216, %v231
  %v240 = vmul.f32 %v217, %v231
  %v241 = vmul.f32 %v218, %v231
  %v242 = vmul.f32 %v219, %v231
  %v243 = vmul.f32 %v220, %v231
  %v244 = vmul.f32 %v221, %v231
  %v245 = vmul.f32 %v222, %v231
  %v246 = vmul.f32 %v223, %v231
  %v247 = vmul.f32 %v224, %v231
  %v248 = vmul.f32 %v225, %v231
  %v249 = vld [vmem:[%s2] sm:$0x1]
  %v251 = vlaneseq
  %v252 = vshrl.u32 %v251, 7
  %v253 = vsub.s32 0, %v252
  %v254 = vrot.slane %v249, %v253
  %v256 = vadd.f32 %v233, %v254
  %v257 = vadd.f32 %v234, %v254
  %v258 = vadd.f32 %v235, %v254
  %v259 = vadd.f32 %v236, %v254
  %v260 = vadd.f32 %v237, %v254
  %v261 = vadd.f32 %v238, %v254
  %v262 = vadd.f32 %v239, %v254
  %v263 = vadd.f32 %v240, %v254
  %v264 = vadd.f32 %v241, %v254
  %v265 = vadd.f32 %v242, %v254
  %v266 = vadd.f32 %v243, %v254
  %v267 = vadd.f32 %v244, %v254
  %v268 = vadd.f32 %v245, %v254
  %v269 = vadd.f32 %v246, %v254
  %v270 = vadd.f32 %v247, %v254
  %v271 = vadd.f32 %v248, %v254
  %v272 = vld [vmem:[%s5] sm:$0x1]
  %v274 = vlaneseq
  %v275 = vshrl.u32 %v274, 7
  %v276 = vsub.s32 0, %v275
  %v277 = vrot.slane %v272, %v276
  %v279 = vmul.f32 %v148, %v277
  %v280 = vmul.f32 %v151, %v277
  %v281 = vmul.f32 %v156, %v277
  %v282 = vmul.f32 %v159, %v277
  %v283 = vmul.f32 %v164, %v277
  %v284 = vmul.f32 %v167, %v277
  %v285 = vmul.f32 %v172, %v277
  %v286 = vmul.f32 %v175, %v277
  %v287 = vmul.f32 %v180, %v277
  %v288 = vmul.f32 %v183, %v277
  %v289 = vmul.f32 %v188, %v277
  %v290 = vmul.f32 %v191, %v277
  %v291 = vmul.f32 %v196, %v277
  %v292 = vmul.f32 %v199, %v277
  %v293 = vmul.f32 %v204, %v277
  %v294 = vmul.f32 %v207, %v277
  %v295 = vld [vmem:[%s6] sm:$0x1]
  %v297 = vlaneseq
  %v298 = vshrl.u32 %v297, 7
  %v299 = vsub.s32 0, %v298
  %v300 = vrot.slane %v295, %v299
  %v302 = vadd.f32 %v279, %v300
  %v303 = vadd.f32 %v280, %v300
  %v304 = vadd.f32 %v281, %v300
  %v305 = vadd.f32 %v282, %v300
  %v306 = vadd.f32 %v283, %v300
  %v307 = vadd.f32 %v284, %v300
  %v308 = vadd.f32 %v285, %v300
  %v309 = vadd.f32 %v286, %v300
  %v310 = vadd.f32 %v287, %v300
  %v311 = vadd.f32 %v288, %v300
  %v312 = vadd.f32 %v289, %v300
  %v313 = vadd.f32 %v290, %v300
  %v314 = vadd.f32 %v291, %v300
  %v315 = vadd.f32 %v292, %v300
  %v316 = vadd.f32 %v293, %v300
  %v317 = vadd.f32 %v294, %v300
  %v318 = vadd.f32 %v256, %v302
  %v319 = vadd.f32 %v257, %v303
  %v320 = vadd.f32 %v258, %v304
  %v321 = vadd.f32 %v259, %v305
  %v322 = vadd.f32 %v260, %v306
  %v323 = vadd.f32 %v261, %v307
  %v324 = vadd.f32 %v262, %v308
  %v325 = vadd.f32 %v263, %v309
  %v326 = vadd.f32 %v264, %v310
  %v327 = vadd.f32 %v265, %v311
  %v328 = vadd.f32 %v266, %v312
  %v329 = vadd.f32 %v267, %v313
  %v330 = vadd.f32 %v268, %v314
  %v331 = vadd.f32 %v269, %v315
  %v332 = vadd.f32 %v270, %v316
  %v333 = vadd.f32 %v271, %v317
  %v334 = vmax.f32 %v318, 0.0
  %v335 = vmax.f32 %v319, 0.0
  %v336 = vmax.f32 %v320, 0.0
  %v337 = vmax.f32 %v321, 0.0
  %v338 = vmax.f32 %v322, 0.0
  %v339 = vmax.f32 %v323, 0.0
  %v340 = vmax.f32 %v324, 0.0
  %v341 = vmax.f32 %v325, 0.0
  %v342 = vmax.f32 %v326, 0.0
  %v343 = vmax.f32 %v327, 0.0
  %v344 = vmax.f32 %v328, 0.0
  %v345 = vmax.f32 %v329, 0.0
  %v346 = vmax.f32 %v330, 0.0
  %v347 = vmax.f32 %v331, 0.0
  %v348 = vmax.f32 %v332, 0.0
  %v349 = vmax.f32 %v333, 0.0
  %350 = vst [vmem:[%s7] sm:$0xff] %v334
  %351 = vst [vmem:[%s7 + $0x8] sm:$0xff] %v335
  %352 = vst [vmem:[%s7 + $0x10] sm:$0xff] %v336
  %353 = vst [vmem:[%s7 + $0x18] sm:$0xff] %v337
  %354 = vst [vmem:[%s7 + $0x20] sm:$0xff] %v338
  %355 = vst [vmem:[%s7 + $0x28] sm:$0xff] %v339
  %356 = vst [vmem:[%s7 + $0x30] sm:$0xff] %v340
  %357 = vst [vmem:[%s7 + $0x38] sm:$0xff] %v341
  %358 = vst [vmem:[%s7 + $0x40] sm:$0xff] %v342
  %359 = vst [vmem:[%s7 + $0x48] sm:$0xff] %v343
  %360 = vst [vmem:[%s7 + $0x50] sm:$0xff] %v344
  %361 = vst [vmem:[%s7 + $0x58] sm:$0xff] %v345
  %362 = vst [vmem:[%s7 + $0x60] sm:$0xff] %v346
  %363 = vst [vmem:[%s7 + $0x68] sm:$0xff] %v347
  %364 = vst [vmem:[%s7 + $0x70] sm:$0xff] %v348
  %365 = vst [vmem:[%s7 + $0x78] sm:$0xff] %v349
  // Predicated region
  $region30: #{residual_block_forward.7} parent=0 // pred_check
    _
  $region31: #{residual_block_forward.7} parent=0 // pred_check_branch
    %367 = sbr.rel (0) target = $region33
  $region32: #{residual_block_forward.7} parent=0 // pred_region
    _
  $region33: #{residual_block_forward.7} parent=0 // pred_fallthru
    _
  // Predicated region
  $region34: #{residual_block_forward.7} parent=0 // pred_check
    _
  $region35: #{residual_block_forward.7} parent=0 // pred_check_branch
    %369 = sbr.rel (0) target = $region37
  $region36: #{residual_block_forward.7} parent=0 // pred_region
    _
  $region37: #{residual_block_forward.7} parent=0 // pred_fallthru
    _

</llo_original>
